<compile_context>
chip_gen: v5e
topology: v5e:2x2
jax: 0.10.0
libtpu: 0.0.40
codegen_flags: <defaults>
</compile_context>

<pallas_src>
import functools

import jax
import jax.numpy as jnp
from jax.experimental import pallas as pl
from jax.experimental.pallas import tpu as pltpu

NEG_INF = -1.0e9       # matches torch masked_fill(-1000000000.0)
LN_EPS = 1e-5          # PyTorch nn.LayerNorm default


def _layernorm(x, g, b):
    mean = jnp.mean(x, axis=-1, keepdims=True)
    var = jnp.mean((x - mean) ** 2, axis=-1, keepdims=True)  # biased, like PyTorch
    return (x - mean) * jax.lax.rsqrt(var + LN_EPS) * g + b


# ---------------------------------------------------------------------------
# Fused whole-model kernel
# ---------------------------------------------------------------------------
def fused_transformer_kernel(
    # inputs
    x_ref, mask_ref,
    wqkv_ref, bqkv_ref, wo_ref, bo_ref,
    ln1_g_ref, ln1_b_ref, w1_ref, b1_ref, w2_ref, b2_ref,
    ln2_g_ref, ln2_b_ref,
    enc_g_ref, enc_b_ref, dec_g_ref, dec_b_ref, wout_ref, bout_ref,
    # outputs
    o_ref,
    # scratch
    act_ref,
    *, num_heads, num_enc_layers):
    layer = pl.program_id(1)
    n_total = pl.num_programs(1)
    TB, S, H = act_ref.shape
    M = TB * S
    nH = num_heads

    # First layer of this batch block: load the input activation.
    # NOTE: act_ref carries state across the layer grid axis, so that axis
    # MUST stay sequential ("arbitrary"); only the batch axis may be parallel.
    @pl.when(layer == 0)
    def _():
        act_ref[...] = x_ref[...]

    x3 = act_ref[...]                      # (TB, S, H) f32 activation carry
    x2 = x3.reshape(M, H)                  # fold batch into the matmul M dim
    x2_bf = x2.astype(jnp.bfloat16)
    mask = mask_ref[...]                   # (TB, S, S) int32, 1=attend 0=masked

    # ---- multi-head attention (each head projects H -> H, no 1/sqrt(d)) ----
    attn = jnp.zeros((M, H), jnp.float32)
    for h in range(nH):                    # static unroll; nH is small
        # per-head weights live on a leading Ref axis -> free, lane-aligned slices
        q = jnp.dot(x2_bf, wqkv_ref[0, h],
                    preferred_element_type=jnp.float32) + bqkv_ref[0, h]
        k = jnp.dot(x2_bf, wqkv_ref[0, nH + h],
                    preferred_element_type=jnp.float32) + bqkv_ref[0, nH + h]
        v = jnp.dot(x2_bf, wqkv_ref[0, 2 * nH + h],
                    preferred_element_type=jnp.float32) + bqkv_ref[0, 2 * nH + h]
        q3 = q.reshape(TB, S, H).astype(jnp.bfloat16)
        k3 = k.reshape(TB, S, H).astype(jnp.bfloat16)
        v3 = v.reshape(TB, S, H).astype(jnp.bfloat16)

        # scores: (TB, S, S) — attention is per-sample, so keep it batched
        s = jax.lax.dot_general(q3, k3, (((2,), (2,)), ((0,), (0,))),
                                preferred_element_type=jnp.float32)
        s = jnp.where(mask == 0, NEG_INF, s)          # masked_fill semantics
        s = s - jnp.max(s, axis=-1, keepdims=True)
        p = jnp.exp(s)
        p = p / jnp.sum(p, axis=-1, keepdims=True)    # exact softmax division
        ctx = jax.lax.dot_general(p.astype(jnp.bfloat16), v3,
                                  (((2,), (1,)), ((0,), (0,))),
                                  preferred_element_type=jnp.float32)  # (TB,S,H)
        # per-head contribution to the output projection (block matmul ==
        # concat(heads) @ Wo, no lane-axis concatenate needed)
        attn = attn + jnp.dot(ctx.reshape(M, H).astype(jnp.bfloat16),
                              wo_ref[0, h], preferred_element_type=jnp.float32)
    attn = attn + bo_ref[0]

    # dropout layers are identity in eval mode
    h1 = _layernorm(x2 + attn, ln1_g_ref[0], ln1_b_ref[0])       # (M, H) f32

    # ---- feed-forward: Linear(H,4H) -> ReLU -> Linear(4H,H) ----
    ff = jnp.dot(h1.astype(jnp.bfloat16), w1_ref[0],
                 preferred_element_type=jnp.float32) + b1_ref[0]
    ff = jnp.maximum(ff, 0.0)
    ff = jnp.dot(ff.astype(jnp.bfloat16), w2_ref[0],
                 preferred_element_type=jnp.float32) + b2_ref[0]
    out2 = _layernorm(h1 + ff, ln2_g_ref[0], ln2_b_ref[0])        # (M, H) f32

    # carry activation to the next layer (encoder_norm after the last encoder layer)
    @pl.when(layer == num_enc_layers - 1)
    def _():
        enc = _layernorm(out2, enc_g_ref[...], enc_b_ref[...])
        act_ref[...] = enc.reshape(TB, S, H)

    @pl.when(layer != num_enc_layers - 1)
    def _():
        act_ref[...] = out2.reshape(TB, S, H)

    # epilogue fused into the last decoder layer: decoder_norm + output projection
    @pl.when(layer == n_total - 1)
    def _():
        final = _layernorm(out2, dec_g_ref[...], dec_b_ref[...])
        y = jnp.dot(final.astype(jnp.bfloat16), wout_ref[...],
                    preferred_element_type=jnp.float32) + bout_ref[...]
        o_ref[...] = y.reshape(TB, S, H)


# ---------------------------------------------------------------------------
# Wrapper
# ---------------------------------------------------------------------------
@functools.partial(jax.jit, static_argnums=(4, 5, 6))
def transformer_forward(x, mask, stacked, final, num_heads, num_enc_layers,
                        num_batch_blocks):
    B, S, H = x.shape
    L = stacked[0].shape[0]                 # total layers = 2 * num_enc_layers
    assert B % num_batch_blocks == 0
    TB = B // num_batch_blocks
    mask_i = mask.astype(jnp.int32)

    kernel = functools.partial(fused_transformer_kernel,
                               num_heads=num_heads,
                               num_enc_layers=num_enc_layers)

    def per_layer_spec(a):   # stacked (L, ...): pick layer l's slice
        nd = a.ndim
        return pl.BlockSpec((1,) + a.shape[1:],
                            lambda b, l, _nd=nd: (l,) + (0,) * (_nd - 1))

    def invariant_spec(a):   # grid-invariant param
        nd = a.ndim
        return pl.BlockSpec(a.shape, lambda b, l, _nd=nd: (0,) * _nd)

    in_specs = (
        [pl.BlockSpec((TB, S, H), lambda b, l: (b, 0, 0)),    # x
         pl.BlockSpec((TB, S, S), lambda b, l: (b, 0, 0))]    # mask (int32)
        + [per_layer_spec(a) for a in stacked]
        + [invariant_spec(a) for a in final]
    )

    # Advisory cost estimate so XLA schedules around the single fused call.
    nH = num_heads
    flops_per_layer = 2 * B * S * (3 * nH * H * H       # QKV projections
                                   + 2 * nH * S * H      # scores + context
                                   + nH * H * H          # output projection
                                   + 8 * H * H)          # FFN (H*4H + 4H*H)
    flops = L * flops_per_layer + 2 * B * S * H * H      # + final projection
    transcendentals = L * nH * B * S * S                  # softmax exps
    bytes_accessed = (sum(a.size * a.dtype.itemsize for a in stacked)
                      + sum(a.size * a.dtype.itemsize for a in final)
                      + x.size * 4 + mask_i.size * 4 + B * S * H * 4)

    return pl.pallas_call(
        kernel,
        out_shape=jax.ShapeDtypeStruct((B, S, H), jnp.float32),
        grid=(num_batch_blocks, L),
        in_specs=in_specs,
        out_specs=pl.BlockSpec((TB, S, H), lambda b, l: (b, 0, 0)),
        scratch_shapes=[pltpu.VMEM((TB, S, H), jnp.float32)],  # activation carry
        compiler_params=pltpu.CompilerParams(
            # batch axis parallel (v7x megacore), layer axis MUST be sequential
            # because act_ref carries the activation across it.
            dimension_semantics=("parallel", "arbitrary"),
            vmem_limit_bytes=64 * 1024 * 1024),
        cost_estimate=pl.CostEstimate(flops=flops,
                                      transcendentals=transcendentals,
                                      bytes_accessed=bytes_accessed),
    )(x, mask_i, *stacked, *final)


# ---------------------------------------------------------------------------
# Deterministic parameter init (PyTorch nn.Linear-style uniform bounds).
# Matmul weights are stored in bfloat16 (the model's canonical storage format);
# biases and LayerNorm parameters stay float32.  Q/K/V and output-projection
# weights are stored per head on a leading axis so the kernel slices them on
# the Ref's leading dim (lane-aligned, free).
# ---------------------------------------------------------------------------
def _init_linear(key, in_dim, out_dim):
    kw, kb = jax.random.split(key)
    bound = 1.0 / (in_dim ** 0.5)
    w = jax.random.uniform(kw, (in_dim, out_dim), jnp.float32, -bound, bound)
    b = jax.random.uniform(kb, (1, out_dim), jnp.float32, -bound, bound)
    return w, b


def _init_layer(key, H, nH):
    keys = jax.random.split(key, 3 * nH + 3)
    qkv_w, qkv_b = [], []
    for i in range(3 * nH):                       # [q heads..., k heads..., v heads...]
        w, b = _init_linear(keys[i], H, H)
        qkv_w.append(w)
        qkv_b.append(b)
    wqkv = jnp.stack(qkv_w).astype(jnp.bfloat16)  # (3*nH, H, H)
    bqkv = jnp.stack(qkv_b)                       # (3*nH, 1, H) f32
    wo_full, bo = _init_linear(keys[3 * nH], nH * H, H)
    wo = wo_full.reshape(nH, H, H).astype(jnp.bfloat16)   # row-block h == Wo[h*H:(h+1)*H]
    w1, b1 = _init_linear(keys[3 * nH + 1], H, 4 * H)
    w2, b2 = _init_linear(keys[3 * nH + 2], 4 * H, H)
    w1 = w1.astype(jnp.bfloat16)
    w2 = w2.astype(jnp.bfloat16)
    ln1_g = jnp.ones((1, H), jnp.float32)
    ln1_b = jnp.zeros((1, H), jnp.float32)
    ln2_g = jnp.ones((1, H), jnp.float32)
    ln2_b = jnp.zeros((1, H), jnp.float32)
    return (wqkv, bqkv, wo, bo, ln1_g, ln1_b, w1, b1, w2, b2, ln2_g, ln2_b)


def init_transformer(key, num_layers, H, nH):
    L = 2 * num_layers                         # encoder layers then decoder layers
    keys = jax.random.split(key, L + 1)
    layers = [_init_layer(keys[i], H, nH) for i in range(L)]
    stacked = tuple(jnp.stack([layers[l][i] for l in range(L)], axis=0)
                    for i in range(len(layers[0])))
    enc_g = jnp.ones((1, H), jnp.float32)
    enc_b = jnp.zeros((1, H), jnp.float32)
    dec_g = jnp.ones((1, H), jnp.float32)
    dec_b = jnp.zeros((1, H), jnp.float32)
    wout, bout = _init_linear(keys[-1], H, H)
    wout = wout.astype(jnp.bfloat16)
    final = (enc_g, enc_b, dec_g, dec_b, wout, bout)
    return stacked, final


# ---------------------------------------------------------------------------
# Pure-JAX f32 reference (mirrors the PyTorch module, eval mode).
# Uses the same (bf16-stored) weights upcast to f32.
# ---------------------------------------------------------------------------
def reference_forward(x, mask, stacked, final, num_heads, num_enc_layers):
    (wqkv, bqkv, wo, bo, ln1_g, ln1_b, w1, b1, w2, b2, ln2_g, ln2_b) = stacked
    enc_g, enc_b, dec_g, dec_b, wout, bout = final
    L = wqkv.shape[0]
    f32 = lambda a: a.astype(jnp.float32)

    def layer(x, l):
        heads = []
        for h in range(num_heads):
            q = x @ f32(wqkv[l, h]) + bqkv[l, h]
            k = x @ f32(wqkv[l, num_heads + h]) + bqkv[l, num_heads + h]
            v = x @ f32(wqkv[l, 2 * num_heads + h]) + bqkv[l, 2 * num_heads + h]
            s = jnp.einsum('bqd,bkd->bqk', q, k)
            s = jnp.where(mask == 0, NEG_INF, s)
            p = jax.nn.softmax(s, axis=-1)
            heads.append(jnp.einsum('bqk,bkd->bqd', p, v))
        cat = jnp.concatenate(heads, axis=-1)
        wo_full = jnp.concatenate([f32(wo[l, h]) for h in range(num_heads)], axis=0)
        attn = cat @ wo_full + bo[l]
        h1 = _layernorm(x + attn, ln1_g[l], ln1_b[l])
        ff = jnp.maximum(h1 @ f32(w1[l]) + b1[l], 0.0) @ f32(w2[l]) + b2[l]
        return _layernorm(h1 + ff, ln2_g[l], ln2_b[l])

    for l in range(num_enc_layers):
        x = layer(x, l)
    x = _layernorm(x, enc_g, enc_b)
    for l in range(num_enc_layers, L):
        x = layer(x, l)
    x = _layernorm(x, dec_g, dec_b)
    return x @ f32(wout) + bout


# ---------------------------------------------------------------------------
if __name__ == "__main__":
    # Small shapes consistent with the module's forward (B, S, hidden).
    B, S, H = 2, 8, 32
    NUM_HEADS, NUM_LAYERS = 2, 2

    key = jax.random.PRNGKey(0)
    k_x, k_p = jax.random.split(key)

    x = jax.random.normal(k_x, (B, S, H), jnp.float32)
    # Deterministic causal-style mask: 1 = attend, 0 = masked.
    mask = jnp.broadcast_to(jnp.tril(jnp.ones((S, S), jnp.int32)), (B, S, S))

    stacked, final = init_transformer(k_p, NUM_LAYERS, H, NUM_HEADS)

    # num_batch_blocks=1: the full batch is one block (weights DMA'd once per
    # layer; best for single-TensorCore v5e/v6e).  On v7x use 2 so the
    # "parallel" batch axis shards across both TensorCores.
    # TODO(synk): dropout layers are identity here (eval-mode semantics).
    out = transformer_forward(x, mask, stacked, final, NUM_HEADS, NUM_LAYERS, 1)
    out = jax.block_until_ready(out)

    ref = reference_forward(x, mask, stacked, final, NUM_HEADS, NUM_LAYERS)
    err = float(jnp.max(jnp.abs(out - ref)))

    assert out.shape == (B, S, H) and out.dtype == jnp.float32
    # bf16 MXU operands introduce ~1e-2-level absolute error vs the f32 reference.
    assert err < 5e-2, f"mismatch vs reference: max abs err = {err}"
    print("KERNEL_OK")
</pallas_src>

<mosaic_0001>
module attributes {stable_mosaic.version = 11 : i64} {
  func.func @fused_transformer_kernel(%arg0: i32, %arg1: i32, %arg2: memref<2x8x32xf32, #tpu.memory_space<vmem>>, %arg3: memref<2x8x8xi32, #tpu.memory_space<vmem>>, %arg4: memref<1x6x32x32xbf16, #tpu.memory_space<vmem>>, %arg5: memref<1x6x1x32xf32, #tpu.memory_space<vmem>>, %arg6: memref<1x2x32x32xbf16, #tpu.memory_space<vmem>>, %arg7: memref<1x1x32xf32, #tpu.memory_space<vmem>>, %arg8: memref<1x1x32xf32, #tpu.memory_space<vmem>>, %arg9: memref<1x1x32xf32, #tpu.memory_space<vmem>>, %arg10: memref<1x32x128xbf16, #tpu.memory_space<vmem>>, %arg11: memref<1x1x128xf32, #tpu.memory_space<vmem>>, %arg12: memref<1x128x32xbf16, #tpu.memory_space<vmem>>, %arg13: memref<1x1x32xf32, #tpu.memory_space<vmem>>, %arg14: memref<1x1x32xf32, #tpu.memory_space<vmem>>, %arg15: memref<1x1x32xf32, #tpu.memory_space<vmem>>, %arg16: memref<1x32xf32, #tpu.memory_space<vmem>>, %arg17: memref<1x32xf32, #tpu.memory_space<vmem>>, %arg18: memref<1x32xf32, #tpu.memory_space<vmem>>, %arg19: memref<1x32xf32, #tpu.memory_space<vmem>>, %arg20: memref<32x32xbf16, #tpu.memory_space<vmem>>, %arg21: memref<1x32xf32, #tpu.memory_space<vmem>>, %arg22: memref<2x8x32xf32, #tpu.memory_space<vmem>>, %arg23: memref<2x8x32xf32, #tpu.memory_space<vmem>>) attributes {dimension_semantics = [#tpu.dimension_semantics<parallel>, #tpu.dimension_semantics<arbitrary>], iteration_bounds = array<i64: 1, 4>, scalar_prefetch = 0 : i64, scratch_operands = 1 : i64, tpu.core_type = #tpu.core_type<tc>, window_params = [{transform_indices = @transform_0, window_bounds = array<i64: 2, 8, 32>}, {transform_indices = @transform_1, window_bounds = array<i64: 2, 8, 8>}, {transform_indices = @transform_2, window_bounds = array<i64: 1, 6, 32, 32>}, {transform_indices = @transform_3, window_bounds = array<i64: 1, 6, 1, 32>}, {transform_indices = @transform_4, window_bounds = array<i64: 1, 2, 32, 32>}, {transform_indices = @transform_5, window_bounds = array<i64: 1, 1, 32>}, {transform_indices = @transform_6, window_bounds = array<i64: 1, 1, 32>}, {transform_indices = @transform_7, window_bounds = array<i64: 1, 1, 32>}, {transform_indices = @transform_8, window_bounds = array<i64: 1, 32, 128>}, {transform_indices = @transform_9, window_bounds = array<i64: 1, 1, 128>}, {transform_indices = @transform_10, window_bounds = array<i64: 1, 128, 32>}, {transform_indices = @transform_11, window_bounds = array<i64: 1, 1, 32>}, {transform_indices = @transform_12, window_bounds = array<i64: 1, 1, 32>}, {transform_indices = @transform_13, window_bounds = array<i64: 1, 1, 32>}, {pipeline_mode = #tpu.pipeline_mode<synchronous>, transform_indices = @transform_14, window_bounds = array<i64: 1, 32>}, {pipeline_mode = #tpu.pipeline_mode<synchronous>, transform_indices = @transform_15, window_bounds = array<i64: 1, 32>}, {pipeline_mode = #tpu.pipeline_mode<synchronous>, transform_indices = @transform_16, window_bounds = array<i64: 1, 32>}, {pipeline_mode = #tpu.pipeline_mode<synchronous>, transform_indices = @transform_17, window_bounds = array<i64: 1, 32>}, {pipeline_mode = #tpu.pipeline_mode<synchronous>, transform_indices = @transform_18, window_bounds = array<i64: 32, 32>}, {pipeline_mode = #tpu.pipeline_mode<synchronous>, transform_indices = @transform_19, window_bounds = array<i64: 1, 32>}, {transform_indices = @transform_20, window_bounds = array<i64: 2, 8, 32>}]} {
    %c0_i32 = arith.constant 0 : i32
    %0 = arith.cmpi eq, %arg1, %c0_i32 : i32
    %1 = arith.extui %0 : i1 to i32
    %c0_i32_0 = arith.constant 0 : i32
    %2 = arith.cmpi ne, %1, %c0_i32_0 : i32
    scf.if %2 {
      %c0_121 = arith.constant 0 : index
      %c0_122 = arith.constant 0 : index
      %c0_123 = arith.constant 0 : index
      %191 = vector.load %arg2[%c0_121, %c0_122, %c0_123] : memref<2x8x32xf32, #tpu.memory_space<vmem>>, vector<2x8x32xf32>
      %c0_124 = arith.constant 0 : index
      %c0_125 = arith.constant 0 : index
      %c0_126 = arith.constant 0 : index
      %192 = vector.load %arg23[%c0_124, %c0_125, %c0_126] : memref<2x8x32xf32, #tpu.memory_space<vmem>>, vector<2x8x32xf32>
      tpu.vector_store %arg23[%c0_124, %c0_125, %c0_126], %191 {strides = array<i32>} : memref<2x8x32xf32, #tpu.memory_space<vmem>>, vector<2x8x32xf32>,
    } else {
    }
    %c0 = arith.constant 0 : index
    %c0_1 = arith.constant 0 : index
    %c0_2 = arith.constant 0 : index
    %3 = vector.load %arg23[%c0, %c0_1, %c0_2] : memref<2x8x32xf32, #tpu.memory_space<vmem>>, vector<2x8x32xf32>
    %4 = vector.shape_cast %3 : vector<2x8x32xf32> to vector<16x32xf32>
    %5 = arith.truncf %4 : vector<16x32xf32> to vector<16x32xbf16>
    %c0_3 = arith.constant 0 : index
    %c0_4 = arith.constant 0 : index
    %c0_5 = arith.constant 0 : index
    %6 = vector.load %arg3[%c0_3, %c0_4, %c0_5] : memref<2x8x8xi32, #tpu.memory_space<vmem>>, vector<2x8x8xi32>
    %cst = arith.constant 0.000000e+00 : f32
    %7 = vector.broadcast %cst : f32 to vector<16x32xf32>
    %c0_6 = arith.constant 0 : index
    %c0_7 = arith.constant 0 : index
    %c0_8 = arith.constant 0 : index
    %c0_9 = arith.constant 0 : index
    %8 = vector.load %arg4[%c0_6, %c0_7, %c0_8, %c0_9] : memref<1x6x32x32xbf16, #tpu.memory_space<vmem>>, vector<1x1x32x32xbf16>
    %9 = vector.shape_cast %8 : vector<1x1x32x32xbf16> to vector<32x32xbf16>
    %cst_10 = arith.constant dense<0.000000e+00> : vector<16x32xf32>
    %10 = tpu.matmul %5, %9, %cst_10 {dimension_numbers = #tpu.dot_dimension_numbers<[1], [0], [0], [1], [0, 0, 1, 1], [], []>} : vector<16x32xbf16>, vector<32x32xbf16>, vector<16x32xf32> -> vector<16x32xf32>
    %c0_11 = arith.constant 0 : index
    %c0_12 = arith.constant 0 : index
    %c0_13 = arith.constant 0 : index
    %c0_14 = arith.constant 0 : index
    %11 = vector.load %arg5[%c0_11, %c0_12, %c0_13, %c0_14] : memref<1x6x1x32xf32, #tpu.memory_space<vmem>>, vector<1x1x1x32xf32>
    %12 = vector.shape_cast %11 : vector<1x1x1x32xf32> to vector<1x32xf32>
    %13 = vector.broadcast %12 : vector<1x32xf32> to vector<16x32xf32>
    %14 = arith.addf %10, %13 : vector<16x32xf32>
    %c0_15 = arith.constant 0 : index
    %c2 = arith.constant 2 : index
    %c0_16 = arith.constant 0 : index
    %c0_17 = arith.constant 0 : index
    %15 = vector.load %arg4[%c0_15, %c2, %c0_16, %c0_17] : memref<1x6x32x32xbf16, #tpu.memory_space<vmem>>, vector<1x1x32x32xbf16>
    %16 = vector.shape_cast %15 : vector<1x1x32x32xbf16> to vector<32x32xbf16>
    %cst_18 = arith.constant dense<0.000000e+00> : vector<16x32xf32>
    %17 = tpu.matmul %5, %16, %cst_18 {dimension_numbers = #tpu.dot_dimension_numbers<[1], [0], [0], [1], [0, 0, 1, 1], [], []>} : vector<16x32xbf16>, vector<32x32xbf16>, vector<16x32xf32> -> vector<16x32xf32>
    %c0_19 = arith.constant 0 : index
    %c2_20 = arith.constant 2 : index
    %c0_21 = arith.constant 0 : index
    %c0_22 = arith.constant 0 : index
    %18 = vector.load %arg5[%c0_19, %c2_20, %c0_21, %c0_22] : memref<1x6x1x32xf32, #tpu.memory_space<vmem>>, vector<1x1x1x32xf32>
    %19 = vector.shape_cast %18 : vector<1x1x1x32xf32> to vector<1x32xf32>
    %20 = vector.broadcast %19 : vector<1x32xf32> to vector<16x32xf32>
    %21 = arith.addf %17, %20 : vector<16x32xf32>
    %c0_23 = arith.constant 0 : index
    %c4 = arith.constant 4 : index
    %c0_24 = arith.constant 0 : index
    %c0_25 = arith.constant 0 : index
    %22 = vector.load %arg4[%c0_23, %c4, %c0_24, %c0_25] : memref<1x6x32x32xbf16, #tpu.memory_space<vmem>>, vector<1x1x32x32xbf16>
    %23 = vector.shape_cast %22 : vector<1x1x32x32xbf16> to vector<32x32xbf16>
    %cst_26 = arith.constant dense<0.000000e+00> : vector<16x32xf32>
    %24 = tpu.matmul %5, %23, %cst_26 {dimension_numbers = #tpu.dot_dimension_numbers<[1], [0], [0], [1], [0, 0, 1, 1], [], []>} : vector<16x32xbf16>, vector<32x32xbf16>, vector<16x32xf32> -> vector<16x32xf32>
    %c0_27 = arith.constant 0 : index
    %c4_28 = arith.constant 4 : index
    %c0_29 = arith.constant 0 : index
    %c0_30 = arith.constant 0 : index
    %25 = vector.load %arg5[%c0_27, %c4_28, %c0_29, %c0_30] : memref<1x6x1x32xf32, #tpu.memory_space<vmem>>, vector<1x1x1x32xf32>
    %26 = vector.shape_cast %25 : vector<1x1x1x32xf32> to vector<1x32xf32>
    %27 = vector.broadcast %26 : vector<1x32xf32> to vector<16x32xf32>
    %28 = arith.addf %24, %27 : vector<16x32xf32>
    %29 = vector.shape_cast %14 : vector<16x32xf32> to vector<2x8x32xf32>
    %30 = arith.truncf %29 : vector<2x8x32xf32> to vector<2x8x32xbf16>
    %31 = vector.shape_cast %21 : vector<16x32xf32> to vector<2x8x32xf32>
    %32 = arith.truncf %31 : vector<2x8x32xf32> to vector<2x8x32xbf16>
    %33 = vector.shape_cast %28 : vector<16x32xf32> to vector<2x8x32xf32>
    %34 = arith.truncf %33 : vector<2x8x32xf32> to vector<2x8x32xbf16>
    %cst_31 = arith.constant dense<0.000000e+00> : vector<2x8x8xf32>
    %35 = tpu.matmul %30, %32, %cst_31 {dimension_numbers = #tpu.dot_dimension_numbers<[2], [2], [1], [1], [0, 0, 0, 1, 1, 1], [0], [0]>} : vector<2x8x32xbf16>, vector<2x8x32xbf16>, vector<2x8x8xf32> -> vector<2x8x8xf32>
    %c0_i32_32 = arith.constant 0 : i32
    %36 = vector.broadcast %c0_i32_32 : i32 to vector<2x8x8xi32>
    %37 = arith.cmpi eq, %6, %36 : vector<2x8x8xi32>
    %cst_33 = arith.constant -1.000000e+09 : f32
    %38 = vector.broadcast %cst_33 : f32 to vector<2x8x8xf32>
    %39 = arith.select %37, %38, %35 : vector<2x8x8xi1>, vector<2x8x8xf32>
    %cst_34 = arith.constant dense<0xFF800000> : vector<2x8xf32>
    %40 = vector.multi_reduction <maximumf>, %39, %cst_34 [2] : vector<2x8x8xf32> to vector<2x8xf32>
    %41 = vector.shape_cast %40 : vector<2x8xf32> to vector<2x8x1xf32>
    %42 = vector.broadcast %41 : vector<2x8x1xf32> to vector<2x8x8xf32>
    %43 = arith.subf %39, %42 : vector<2x8x8xf32>
    %44 = math.exp %43 : vector<2x8x8xf32>
    %cst_35 = arith.constant dense<0.000000e+00> : vector<2x8xf32>
    %45 = vector.multi_reduction <add>, %44, %cst_35 [2] : vector<2x8x8xf32> to vector<2x8xf32>
    %46 = vector.shape_cast %45 : vector<2x8xf32> to vector<2x8x1xf32>
    %47 = vector.broadcast %46 : vector<2x8x1xf32> to vector<2x8x8xf32>
    %48 = arith.divf %44, %47 : vector<2x8x8xf32>
    %49 = arith.truncf %48 : vector<2x8x8xf32> to vector<2x8x8xbf16>
    %cst_36 = arith.constant dense<0.000000e+00> : vector<2x8x32xf32>
    %50 = tpu.matmul %49, %34, %cst_36 {dimension_numbers = #tpu.dot_dimension_numbers<[2], [1], [1], [2], [0, 0, 0, 1, 1, 2], [0], [0]>} : vector<2x8x8xbf16>, vector<2x8x32xbf16>, vector<2x8x32xf32> -> vector<2x8x32xf32>
    %51 = vector.shape_cast %50 : vector<2x8x32xf32> to vector<16x32xf32>
    %52 = arith.truncf %51 : vector<16x32xf32> to vector<16x32xbf16>
    %c0_37 = arith.constant 0 : index
    %c0_38 = arith.constant 0 : index
    %c0_39 = arith.constant 0 : index
    %c0_40 = arith.constant 0 : index
    %53 = vector.load %arg6[%c0_37, %c0_38, %c0_39, %c0_40] : memref<1x2x32x32xbf16, #tpu.memory_space<vmem>>, vector<1x1x32x32xbf16>
    %54 = vector.shape_cast %53 : vector<1x1x32x32xbf16> to vector<32x32xbf16>
    %cst_41 = arith.constant dense<0.000000e+00> : vector<16x32xf32>
    %55 = tpu.matmul %52, %54, %cst_41 {dimension_numbers = #tpu.dot_dimension_numbers<[1], [0], [0], [1], [0, 0, 1, 1], [], []>} : vector<16x32xbf16>, vector<32x32xbf16>, vector<16x32xf32> -> vector<16x32xf32>
    %56 = arith.addf %7, %55 : vector<16x32xf32>
    %c0_42 = arith.constant 0 : index
    %c1 = arith.constant 1 : index
    %c0_43 = arith.constant 0 : index
    %c0_44 = arith.constant 0 : index
    %57 = vector.load %arg4[%c0_42, %c1, %c0_43, %c0_44] : memref<1x6x32x32xbf16, #tpu.memory_space<vmem>>, vector<1x1x32x32xbf16>
    %58 = vector.shape_cast %57 : vector<1x1x32x32xbf16> to vector<32x32xbf16>
    %cst_45 = arith.constant dense<0.000000e+00> : vector<16x32xf32>
    %59 = tpu.matmul %5, %58, %cst_45 {dimension_numbers = #tpu.dot_dimension_numbers<[1], [0], [0], [1], [0, 0, 1, 1], [], []>} : vector<16x32xbf16>, vector<32x32xbf16>, vector<16x32xf32> -> vector<16x32xf32>
    %c0_46 = arith.constant 0 : index
    %c1_47 = arith.constant 1 : index
    %c0_48 = arith.constant 0 : index
    %c0_49 = arith.constant 0 : index
    %60 = vector.load %arg5[%c0_46, %c1_47, %c0_48, %c0_49] : memref<1x6x1x32xf32, #tpu.memory_space<vmem>>, vector<1x1x1x32xf32>
    %61 = vector.shape_cast %60 : vector<1x1x1x32xf32> to vector<1x32xf32>
    %62 = vector.broadcast %61 : vector<1x32xf32> to vector<16x32xf32>
    %63 = arith.addf %59, %62 : vector<16x32xf32>
    %c0_50 = arith.constant 0 : index
    %c3 = arith.constant 3 : index
    %c0_51 = arith.constant 0 : index
    %c0_52 = arith.constant 0 : index
    %64 = vector.load %arg4[%c0_50, %c3, %c0_51, %c0_52] : memref<1x6x32x32xbf16, #tpu.memory_space<vmem>>, vector<1x1x32x32xbf16>
    %65 = vector.shape_cast %64 : vector<1x1x32x32xbf16> to vector<32x32xbf16>
    %cst_53 = arith.constant dense<0.000000e+00> : vector<16x32xf32>
    %66 = tpu.matmul %5, %65, %cst_53 {dimension_numbers = #tpu.dot_dimension_numbers<[1], [0], [0], [1], [0, 0, 1, 1], [], []>} : vector<16x32xbf16>, vector<32x32xbf16>, vector<16x32xf32> -> vector<16x32xf32>
    %c0_54 = arith.constant 0 : index
    %c3_55 = arith.constant 3 : index
    %c0_56 = arith.constant 0 : index
    %c0_57 = arith.constant 0 : index
    %67 = vector.load %arg5[%c0_54, %c3_55, %c0_56, %c0_57] : memref<1x6x1x32xf32, #tpu.memory_space<vmem>>, vector<1x1x1x32xf32>
    %68 = vector.shape_cast %67 : vector<1x1x1x32xf32> to vector<1x32xf32>
    %69 = vector.broadcast %68 : vector<1x32xf32> to vector<16x32xf32>
    %70 = arith.addf %66, %69 : vector<16x32xf32>
    %c0_58 = arith.constant 0 : index
    %c5 = arith.constant 5 : index
    %c0_59 = arith.constant 0 : index
    %c0_60 = arith.constant 0 : index
    %71 = vector.load %arg4[%c0_58, %c5, %c0_59, %c0_60] : memref<1x6x32x32xbf16, #tpu.memory_space<vmem>>, vector<1x1x32x32xbf16>
    %72 = vector.shape_cast %71 : vector<1x1x32x32xbf16> to vector<32x32xbf16>
    %cst_61 = arith.constant dense<0.000000e+00> : vector<16x32xf32>
    %73 = tpu.matmul %5, %72, %cst_61 {dimension_numbers = #tpu.dot_dimension_numbers<[1], [0], [0], [1], [0, 0, 1, 1], [], []>} : vector<16x32xbf16>, vector<32x32xbf16>, vector<16x32xf32> -> vector<16x32xf32>
    %c0_62 = arith.constant 0 : index
    %c5_63 = arith.constant 5 : index
    %c0_64 = arith.constant 0 : index
    %c0_65 = arith.constant 0 : index
    %74 = vector.load %arg5[%c0_62, %c5_63, %c0_64, %c0_65] : memref<1x6x1x32xf32, #tpu.memory_space<vmem>>, vector<1x1x1x32xf32>
    %75 = vector.shape_cast %74 : vector<1x1x1x32xf32> to vector<1x32xf32>
    %76 = vector.broadcast %75 : vector<1x32xf32> to vector<16x32xf32>
    %77 = arith.addf %73, %76 : vector<16x32xf32>
    %78 = vector.shape_cast %63 : vector<16x32xf32> to vector<2x8x32xf32>
    %79 = arith.truncf %78 : vector<2x8x32xf32> to vector<2x8x32xbf16>
    %80 = vector.shape_cast %70 : vector<16x32xf32> to vector<2x8x32xf32>
    %81 = arith.truncf %80 : vector<2x8x32xf32> to vector<2x8x32xbf16>
    %82 = vector.shape_cast %77 : vector<16x32xf32> to vector<2x8x32xf32>
    %83 = arith.truncf %82 : vector<2x8x32xf32> to vector<2x8x32xbf16>
    %cst_66 = arith.constant dense<0.000000e+00> : vector<2x8x8xf32>
    %84 = tpu.matmul %79, %81, %cst_66 {dimension_numbers = #tpu.dot_dimension_numbers<[2], [2], [1], [1], [0, 0, 0, 1, 1, 1], [0], [0]>} : vector<2x8x32xbf16>, vector<2x8x32xbf16>, vector<2x8x8xf32> -> vector<2x8x8xf32>
    %c0_i32_67 = arith.constant 0 : i32
    %85 = vector.broadcast %c0_i32_67 : i32 to vector<2x8x8xi32>
    %86 = arith.cmpi eq, %6, %85 : vector<2x8x8xi32>
    %cst_68 = arith.constant -1.000000e+09 : f32
    %87 = vector.broadcast %cst_68 : f32 to vector<2x8x8xf32>
    %88 = arith.select %86, %87, %84 : vector<2x8x8xi1>, vector<2x8x8xf32>
    %cst_69 = arith.constant dense<0xFF800000> : vector<2x8xf32>
    %89 = vector.multi_reduction <maximumf>, %88, %cst_69 [2] : vector<2x8x8xf32> to vector<2x8xf32>
    %90 = vector.shape_cast %89 : vector<2x8xf32> to vector<2x8x1xf32>
    %91 = vector.broadcast %90 : vector<2x8x1xf32> to vector<2x8x8xf32>
    %92 = arith.subf %88, %91 : vector<2x8x8xf32>
    %93 = math.exp %92 : vector<2x8x8xf32>
    %cst_70 = arith.constant dense<0.000000e+00> : vector<2x8xf32>
    %94 = vector.multi_reduction <add>, %93, %cst_70 [2] : vector<2x8x8xf32> to vector<2x8xf32>
    %95 = vector.shape_cast %94 : vector<2x8xf32> to vector<2x8x1xf32>
    %96 = vector.broadcast %95 : vector<2x8x1xf32> to vector<2x8x8xf32>
    %97 = arith.divf %93, %96 : vector<2x8x8xf32>
    %98 = arith.truncf %97 : vector<2x8x8xf32> to vector<2x8x8xbf16>
    %cst_71 = arith.constant dense<0.000000e+00> : vector<2x8x32xf32>
    %99 = tpu.matmul %98, %83, %cst_71 {dimension_numbers = #tpu.dot_dimension_numbers<[2], [1], [1], [2], [0, 0, 0, 1, 1, 2], [0], [0]>} : vector<2x8x8xbf16>, vector<2x8x32xbf16>, vector<2x8x32xf32> -> vector<2x8x32xf32>
    %100 = vector.shape_cast %99 : vector<2x8x32xf32> to vector<16x32xf32>
    %101 = arith.truncf %100 : vector<16x32xf32> to vector<16x32xbf16>
    %c0_72 = arith.constant 0 : index
    %c1_73 = arith.constant 1 : index
    %c0_74 = arith.constant 0 : index
    %c0_75 = arith.constant 0 : index
    %102 = vector.load %arg6[%c0_72, %c1_73, %c0_74, %c0_75] : memref<1x2x32x32xbf16, #tpu.memory_space<vmem>>, vector<1x1x32x32xbf16>
    %103 = vector.shape_cast %102 : vector<1x1x32x32xbf16> to vector<32x32xbf16>
    %cst_76 = arith.constant dense<0.000000e+00> : vector<16x32xf32>
    %104 = tpu.matmul %101, %103, %cst_76 {dimension_numbers = #tpu.dot_dimension_numbers<[1], [0], [0], [1], [0, 0, 1, 1], [], []>} : vector<16x32xbf16>, vector<32x32xbf16>, vector<16x32xf32> -> vector<16x32xf32>
    %105 = arith.addf %56, %104 : vector<16x32xf32>
    %c0_77 = arith.constant 0 : index
    %c0_78 = arith.constant 0 : index
    %c0_79 = arith.constant 0 : index
    %106 = vector.load %arg7[%c0_77, %c0_78, %c0_79] : memref<1x1x32xf32, #tpu.memory_space<vmem>>, vector<1x1x32xf32>
    %107 = vector.shape_cast %106 : vector<1x1x32xf32> to vector<1x32xf32>
    %108 = vector.broadcast %107 : vector<1x32xf32> to vector<16x32xf32>
    %109 = arith.addf %105, %108 : vector<16x32xf32>
    %110 = arith.addf %4, %109 : vector<16x32xf32>
    %c0_80 = arith.constant 0 : index
    %c0_81 = arith.constant 0 : index
    %c0_82 = arith.constant 0 : index
    %111 = vector.load %arg8[%c0_80, %c0_81, %c0_82] : memref<1x1x32xf32, #tpu.memory_space<vmem>>, vector<1x1x32xf32>
    %112 = vector.shape_cast %111 : vector<1x1x32xf32> to vector<1x32xf32>
    %c0_83 = arith.constant 0 : index
    %c0_84 = arith.constant 0 : index
    %c0_85 = arith.constant 0 : index
    %113 = vector.load %arg9[%c0_83, %c0_84, %c0_85] : memref<1x1x32xf32, #tpu.memory_space<vmem>>, vector<1x1x32xf32>
    %114 = vector.shape_cast %113 : vector<1x1x32xf32> to vector<1x32xf32>
    %cst_86 = arith.constant dense<0.000000e+00> : vector<16xf32>
    %115 = vector.multi_reduction <add>, %110, %cst_86 [1] : vector<16x32xf32> to vector<16xf32>
    %116 = vector.shape_cast %115 : vector<16xf32> to vector<16x1xf32>
    %cst_87 = arith.constant 3.200000e+01 : f32
    %117 = vector.broadcast %cst_87 : f32 to vector<16x1xf32>
    %118 = arith.divf %116, %117 : vector<16x1xf32>
    %119 = vector.broadcast %118 : vector<16x1xf32> to vector<16x32xf32>
    %120 = arith.subf %110, %119 : vector<16x32xf32>
    %121 = arith.mulf %120, %120 : vector<16x32xf32>
    %cst_88 = arith.constant dense<0.000000e+00> : vector<16xf32>
    %122 = vector.multi_reduction <add>, %121, %cst_88 [1] : vector<16x32xf32> to vector<16xf32>
    %123 = vector.shape_cast %122 : vector<16xf32> to vector<16x1xf32>
    %cst_89 = arith.constant 3.200000e+01 : f32
    %124 = vector.broadcast %cst_89 : f32 to vector<16x1xf32>
    %125 = arith.divf %123, %124 : vector<16x1xf32>
    %126 = vector.broadcast %118 : vector<16x1xf32> to vector<16x32xf32>
    %127 = arith.subf %110, %126 : vector<16x32xf32>
    %cst_90 = arith.constant 9.99999974E-6 : f32
    %128 = vector.broadcast %cst_90 : f32 to vector<16x1xf32>
    %129 = arith.addf %125, %128 : vector<16x1xf32>
    %130 = math.rsqrt %129 : vector<16x1xf32>
    %131 = vector.broadcast %130 : vector<16x1xf32> to vector<16x32xf32>
    %132 = arith.mulf %127, %131 : vector<16x32xf32>
    %133 = vector.broadcast %112 : vector<1x32xf32> to vector<16x32xf32>
    %134 = arith.mulf %132, %133 : vector<16x32xf32>
    %135 = vector.broadcast %114 : vector<1x32xf32> to vector<16x32xf32>
    %136 = arith.addf %134, %135 : vector<16x32xf32>
    %137 = arith.truncf %136 : vector<16x32xf32> to vector<16x32xbf16>
    %c0_91 = arith.constant 0 : index
    %c0_92 = arith.constant 0 : index
    %c0_93 = arith.constant 0 : index
    %138 = vector.load %arg10[%c0_91, %c0_92, %c0_93] : memref<1x32x128xbf16, #tpu.memory_space<vmem>>, vector<1x32x128xbf16>
    %139 = vector.shape_cast %138 : vector<1x32x128xbf16> to vector<32x128xbf16>
    %cst_94 = arith.constant dense<0.000000e+00> : vector<16x128xf32>
    %140 = tpu.matmul %137, %139, %cst_94 {dimension_numbers = #tpu.dot_dimension_numbers<[1], [0], [0], [1], [0, 0, 1, 1], [], []>} : vector<16x32xbf16>, vector<32x128xbf16>, vector<16x128xf32> -> vector<16x128xf32>
    %c0_95 = arith.constant 0 : index
    %c0_96 = arith.constant 0 : index
    %c0_97 = arith.constant 0 : index
    %141 = vector.load %arg11[%c0_95, %c0_96, %c0_97] : memref<1x1x128xf32, #tpu.memory_space<vmem>>, vector<1x1x128xf32>
    %142 = vector.shape_cast %141 : vector<1x1x128xf32> to vector<1x128xf32>
    %143 = vector.broadcast %142 : vector<1x128xf32> to vector<16x128xf32>
    %144 = arith.addf %140, %143 : vector<16x128xf32>
    %cst_98 = arith.constant 0.000000e+00 : f32
    %145 = vector.broadcast %cst_98 : f32 to vector<16x128xf32>
    %146 = arith.maximumf %144, %145 : vector<16x128xf32>
    %147 = arith.truncf %146 : vector<16x128xf32> to vector<16x128xbf16>
    %c0_99 = arith.constant 0 : index
    %c0_100 = arith.constant 0 : index
    %c0_101 = arith.constant 0 : index
    %148 = vector.load %arg12[%c0_99, %c0_100, %c0_101] : memref<1x128x32xbf16, #tpu.memory_space<vmem>>, vector<1x128x32xbf16>
    %149 = vector.shape_cast %148 : vector<1x128x32xbf16> to vector<128x32xbf16>
    %cst_102 = arith.constant dense<0.000000e+00> : vector<16x32xf32>
    %150 = tpu.matmul %147, %149, %cst_102 {dimension_numbers = #tpu.dot_dimension_numbers<[1], [0], [0], [1], [0, 0, 1, 1], [], []>} : vector<16x128xbf16>, vector<128x32xbf16>, vector<16x32xf32> -> vector<16x32xf32>
    %c0_103 = arith.constant 0 : index
    %c0_104 = arith.constant 0 : index
    %c0_105 = arith.constant 0 : index
    %151 = vector.load %arg13[%c0_103, %c0_104, %c0_105] : memref<1x1x32xf32, #tpu.memory_space<vmem>>, vector<1x1x32xf32>
    %152 = vector.shape_cast %151 : vector<1x1x32xf32> to vector<1x32xf32>
    %153 = vector.broadcast %152 : vector<1x32xf32> to vector<16x32xf32>
    %154 = arith.addf %150, %153 : vector<16x32xf32>
    %155 = arith.addf %136, %154 : vector<16x32xf32>
    %c0_106 = arith.constant 0 : index
    %c0_107 = arith.constant 0 : index
    %c0_108 = arith.constant 0 : index
    %156 = vector.load %arg14[%c0_106, %c0_107, %c0_108] : memref<1x1x32xf32, #tpu.memory_space<vmem>>, vector<1x1x32xf32>
    %157 = vector.shape_cast %156 : vector<1x1x32xf32> to vector<1x32xf32>
    %c0_109 = arith.constant 0 : index
    %c0_110 = arith.constant 0 : index
    %c0_111 = arith.constant 0 : index
    %158 = vector.load %arg15[%c0_109, %c0_110, %c0_111] : memref<1x1x32xf32, #tpu.memory_space<vmem>>, vector<1x1x32xf32>
    %159 = vector.shape_cast %158 : vector<1x1x32xf32> to vector<1x32xf32>
    %cst_112 = arith.constant dense<0.000000e+00> : vector<16xf32>
    %160 = vector.multi_reduction <add>, %155, %cst_112 [1] : vector<16x32xf32> to vector<16xf32>
    %161 = vector.shape_cast %160 : vector<16xf32> to vector<16x1xf32>
    %cst_113 = arith.constant 3.200000e+01 : f32
    %162 = vector.broadcast %cst_113 : f32 to vector<16x1xf32>
    %163 = arith.divf %161, %162 : vector<16x1xf32>
    %164 = vector.broadcast %163 : vector<16x1xf32> to vector<16x32xf32>
    %165 = arith.subf %155, %164 : vector<16x32xf32>
    %166 = arith.mulf %165, %165 : vector<16x32xf32>
    %cst_114 = arith.constant dense<0.000000e+00> : vector<16xf32>
    %167 = vector.multi_reduction <add>, %166, %cst_114 [1] : vector<16x32xf32> to vector<16xf32>
    %168 = vector.shape_cast %167 : vector<16xf32> to vector<16x1xf32>
    %cst_115 = arith.constant 3.200000e+01 : f32
    %169 = vector.broadcast %cst_115 : f32 to vector<16x1xf32>
    %170 = arith.divf %168, %169 : vector<16x1xf32>
    %171 = vector.broadcast %163 : vector<16x1xf32> to vector<16x32xf32>
    %172 = arith.subf %155, %171 : vector<16x32xf32>
    %cst_116 = arith.constant 9.99999974E-6 : f32
    %173 = vector.broadcast %cst_116 : f32 to vector<16x1xf32>
    %174 = arith.addf %170, %173 : vector<16x1xf32>
    %175 = math.rsqrt %174 : vector<16x1xf32>
    %176 = vector.broadcast %175 : vector<16x1xf32> to vector<16x32xf32>
    %177 = arith.mulf %172, %176 : vector<16x32xf32>
    %178 = vector.broadcast %157 : vector<1x32xf32> to vector<16x32xf32>
    %179 = arith.mulf %177, %178 : vector<16x32xf32>
    %180 = vector.broadcast %159 : vector<1x32xf32> to vector<16x32xf32>
    %181 = arith.addf %179, %180 : vector<16x32xf32>
    %c1_i32 = arith.constant 1 : i32
    %182 = arith.cmpi eq, %arg1, %c1_i32 : i32
    %183 = arith.extui %182 : i1 to i32
    %c0_i32_117 = arith.constant 0 : i32
    %184 = arith.cmpi ne, %183, %c0_i32_117 : i32
    scf.if %184 {
      %c0_121 = arith.constant 0 : index
      %c0_122 = arith.constant 0 : index
      %191 = vector.load %arg16[%c0_121, %c0_122] : memref<1x32xf32, #tpu.memory_space<vmem>>, vector<1x32xf32>
      %c0_123 = arith.constant 0 : index
      %c0_124 = arith.constant 0 : index
      %192 = vector.load %arg17[%c0_123, %c0_124] : memref<1x32xf32, #tpu.memory_space<vmem>>, vector<1x32xf32>
      %cst_125 = arith.constant dense<0.000000e+00> : vector<16xf32>
      %193 = vector.multi_reduction <add>, %181, %cst_125 [1] : vector<16x32xf32> to vector<16xf32>
      %194 = vector.shape_cast %193 : vector<16xf32> to vector<16x1xf32>
      %cst_126 = arith.constant 3.200000e+01 : f32
      %195 = vector.broadcast %cst_126 : f32 to vector<16x1xf32>
      %196 = arith.divf %194, %195 : vector<16x1xf32>
      %197 = vector.broadcast %196 : vector<16x1xf32> to vector<16x32xf32>
      %198 = arith.subf %181, %197 : vector<16x32xf32>
      %199 = arith.mulf %198, %198 : vector<16x32xf32>
      %cst_127 = arith.constant dense<0.000000e+00> : vector<16xf32>
      %200 = vector.multi_reduction <add>, %199, %cst_127 [1] : vector<16x32xf32> to vector<16xf32>
      %201 = vector.shape_cast %200 : vector<16xf32> to vector<16x1xf32>
      %cst_128 = arith.constant 3.200000e+01 : f32
      %202 = vector.broadcast %cst_128 : f32 to vector<16x1xf32>
      %203 = arith.divf %201, %202 : vector<16x1xf32>
      %204 = vector.broadcast %196 : vector<16x1xf32> to vector<16x32xf32>
      %205 = arith.subf %181, %204 : vector<16x32xf32>
      %cst_129 = arith.constant 9.99999974E-6 : f32
      %206 = vector.broadcast %cst_129 : f32 to vector<16x1xf32>
      %207 = arith.addf %203, %206 : vector<16x1xf32>
      %208 = math.rsqrt %207 : vector<16x1xf32>
      %209 = vector.broadcast %208 : vector<16x1xf32> to vector<16x32xf32>
      %210 = arith.mulf %205, %209 : vector<16x32xf32>
      %211 = vector.broadcast %191 : vector<1x32xf32> to vector<16x32xf32>
      %212 = arith.mulf %210, %211 : vector<16x32xf32>
      %213 = vector.broadcast %192 : vector<1x32xf32> to vector<16x32xf32>
      %214 = arith.addf %212, %213 : vector<16x32xf32>
      %215 = vector.shape_cast %214 : vector<16x32xf32> to vector<2x8x32xf32>
      %c0_130 = arith.constant 0 : index
      %c0_131 = arith.constant 0 : index
      %c0_132 = arith.constant 0 : index
      %216 = vector.load %arg23[%c0_130, %c0_131, %c0_132] : memref<2x8x32xf32, #tpu.memory_space<vmem>>, vector<2x8x32xf32>
      tpu.vector_store %arg23[%c0_130, %c0_131, %c0_132], %215 {strides = array<i32>} : memref<2x8x32xf32, #tpu.memory_space<vmem>>, vector<2x8x32xf32>,
    } else {
    }
    %c1_i32_118 = arith.constant 1 : i32
    %185 = arith.cmpi ne, %arg1, %c1_i32_118 : i32
    %186 = arith.extui %185 : i1 to i32
    %c0_i32_119 = arith.constant 0 : i32
    %187 = arith.cmpi ne, %186, %c0_i32_119 : i32
    scf.if %187 {
      %191 = vector.shape_cast %181 : vector<16x32xf32> to vector<2x8x32xf32>
      %c0_121 = arith.constant 0 : index
      %c0_122 = arith.constant 0 : index
      %c0_123 = arith.constant 0 : index
      %192 = vector.load %arg23[%c0_121, %c0_122, %c0_123] : memref<2x8x32xf32, #tpu.memory_space<vmem>>, vector<2x8x32xf32>
      tpu.vector_store %arg23[%c0_121, %c0_122, %c0_123], %191 {strides = array<i32>} : memref<2x8x32xf32, #tpu.memory_space<vmem>>, vector<2x8x32xf32>,
    } else {
    }
    %c3_i32 = arith.constant 3 : i32
    %188 = arith.cmpi eq, %arg1, %c3_i32 : i32
    %189 = arith.extui %188 : i1 to i32
    %c0_i32_120 = arith.constant 0 : i32
    %190 = arith.cmpi ne, %189, %c0_i32_120 : i32
    scf.if %190 {
      %c0_121 = arith.constant 0 : index
      %c0_122 = arith.constant 0 : index
      %191 = vector.load %arg18[%c0_121, %c0_122] : memref<1x32xf32, #tpu.memory_space<vmem>>, vector<1x32xf32>
      %c0_123 = arith.constant 0 : index
      %c0_124 = arith.constant 0 : index
      %192 = vector.load %arg19[%c0_123, %c0_124] : memref<1x32xf32, #tpu.memory_space<vmem>>, vector<1x32xf32>
      %cst_125 = arith.constant dense<0.000000e+00> : vector<16xf32>
      %193 = vector.multi_reduction <add>, %181, %cst_125 [1] : vector<16x32xf32> to vector<16xf32>
      %194 = vector.shape_cast %193 : vector<16xf32> to vector<16x1xf32>
      %cst_126 = arith.constant 3.200000e+01 : f32
      %195 = vector.broadcast %cst_126 : f32 to vector<16x1xf32>
      %196 = arith.divf %194, %195 : vector<16x1xf32>
      %197 = vector.broadcast %196 : vector<16x1xf32> to vector<16x32xf32>
      %198 = arith.subf %181, %197 : vector<16x32xf32>
      %199 = arith.mulf %198, %198 : vector<16x32xf32>
      %cst_127 = arith.constant dense<0.000000e+00> : vector<16xf32>
      %200 = vector.multi_reduction <add>, %199, %cst_127 [1] : vector<16x32xf32> to vector<16xf32>
      %201 = vector.shape_cast %200 : vector<16xf32> to vector<16x1xf32>
      %cst_128 = arith.constant 3.200000e+01 : f32
      %202 = vector.broadcast %cst_128 : f32 to vector<16x1xf32>
      %203 = arith.divf %201, %202 : vector<16x1xf32>
      %204 = vector.broadcast %196 : vector<16x1xf32> to vector<16x32xf32>
      %205 = arith.subf %181, %204 : vector<16x32xf32>
      %cst_129 = arith.constant 9.99999974E-6 : f32
      %206 = vector.broadcast %cst_129 : f32 to vector<16x1xf32>
      %207 = arith.addf %203, %206 : vector<16x1xf32>
      %208 = math.rsqrt %207 : vector<16x1xf32>
      %209 = vector.broadcast %208 : vector<16x1xf32> to vector<16x32xf32>
      %210 = arith.mulf %205, %209 : vector<16x32xf32>
      %211 = vector.broadcast %191 : vector<1x32xf32> to vector<16x32xf32>
      %212 = arith.mulf %210, %211 : vector<16x32xf32>
      %213 = vector.broadcast %192 : vector<1x32xf32> to vector<16x32xf32>
      %214 = arith.addf %212, %213 : vector<16x32xf32>
      %215 = arith.truncf %214 : vector<16x32xf32> to vector<16x32xbf16>
      %c0_130 = arith.constant 0 : index
      %c0_131 = arith.constant 0 : index
      %216 = vector.load %arg20[%c0_130, %c0_131] : memref<32x32xbf16, #tpu.memory_space<vmem>>, vector<32x32xbf16>
      %cst_132 = arith.constant dense<0.000000e+00> : vector<16x32xf32>
      %217 = tpu.matmul %215, %216, %cst_132 {dimension_numbers = #tpu.dot_dimension_numbers<[1], [0], [0], [1], [0, 0, 1, 1], [], []>} : vector<16x32xbf16>, vector<32x32xbf16>, vector<16x32xf32> -> vector<16x32xf32>
      %c0_133 = arith.constant 0 : index
      %c0_134 = arith.constant 0 : index
      %218 = vector.load %arg21[%c0_133, %c0_134] : memref<1x32xf32, #tpu.memory_space<vmem>>, vector<1x32xf32>
      %219 = vector.broadcast %218 : vector<1x32xf32> to vector<16x32xf32>
      %220 = arith.addf %217, %219 : vector<16x32xf32>
      %221 = vector.shape_cast %220 : vector<16x32xf32> to vector<2x8x32xf32>
      %c0_135 = arith.constant 0 : index
      %c0_136 = arith.constant 0 : index
      %c0_137 = arith.constant 0 : index
      %222 = vector.load %arg22[%c0_135, %c0_136, %c0_137] : memref<2x8x32xf32, #tpu.memory_space<vmem>>, vector<2x8x32xf32>
      tpu.vector_store %arg22[%c0_135, %c0_136, %c0_137], %221 {strides = array<i32>} : memref<2x8x32xf32, #tpu.memory_space<vmem>>, vector<2x8x32xf32>,
    } else {
    }
    return
  }
  func.func @transform_0(%arg0: i32, %arg1: i32) -> (i32, i32, i32) {
    %c0_i32 = arith.constant 0 : i32
    %c0_i32_0 = arith.constant 0 : i32
    %c0_i32_1 = arith.constant 0 : i32
    return %arg0, %c0_i32, %c0_i32_0 : i32, i32, i32
  }
  func.func @transform_1(%arg0: i32, %arg1: i32) -> (i32, i32, i32) {
    %c0_i32 = arith.constant 0 : i32
    %c0_i32_0 = arith.constant 0 : i32
    %c0_i32_1 = arith.constant 0 : i32
    return %arg0, %c0_i32, %c0_i32_0 : i32, i32, i32
  }
  func.func @transform_2(%arg0: i32, %arg1: i32) -> (i32, i32, i32, i32) {
    %c0_i32 = arith.constant 0 : i32
    %c0_i32_0 = arith.constant 0 : i32
    %c0_i32_1 = arith.constant 0 : i32
    %c0_i32_2 = arith.constant 0 : i32
    return %arg1, %c0_i32, %c0_i32_0, %c0_i32_1 : i32, i32, i32, i32
  }
  func.func @transform_3(%arg0: i32, %arg1: i32) -> (i32, i32, i32, i32) {
    %c0_i32 = arith.constant 0 : i32
    %c0_i32_0 = arith.constant 0 : i32
    %c0_i32_1 = arith.constant 0 : i32
    %c0_i32_2 = arith.constant 0 : i32
    return %arg1, %c0_i32, %c0_i32_0, %c0_i32_1 : i32, i32, i32, i32
  }
  func.func @transform_4(%arg0: i32, %arg1: i32) -> (i32, i32, i32, i32) {
    %c0_i32 = arith.constant 0 : i32
    %c0_i32_0 = arith.constant 0 : i32
    %c0_i32_1 = arith.constant 0 : i32
    %c0_i32_2 = arith.constant 0 : i32
    return %arg1, %c0_i32, %c0_i32_0, %c0_i32_1 : i32, i32, i32, i32
  }
  func.func @transform_5(%arg0: i32, %arg1: i32) -> (i32, i32, i32) {
    %c0_i32 = arith.constant 0 : i32
    %c0_i32_0 = arith.constant 0 : i32
    %c0_i32_1 = arith.constant 0 : i32
    return %arg1, %c0_i32, %c0_i32_0 : i32, i32, i32
  }
  func.func @transform_6(%arg0: i32, %arg1: i32) -> (i32, i32, i32) {
    %c0_i32 = arith.constant 0 : i32
    %c0_i32_0 = arith.constant 0 : i32
    %c0_i32_1 = arith.constant 0 : i32
    return %arg1, %c0_i32, %c0_i32_0 : i32, i32, i32
  }
  func.func @transform_7(%arg0: i32, %arg1: i32) -> (i32, i32, i32) {
    %c0_i32 = arith.constant 0 : i32
    %c0_i32_0 = arith.constant 0 : i32
    %c0_i32_1 = arith.constant 0 : i32
    return %arg1, %c0_i32, %c0_i32_0 : i32, i32, i32
  }
  func.func @transform_8(%arg0: i32, %arg1: i32) -> (i32, i32, i32) {
    %c0_i32 = arith.constant 0 : i32
    %c0_i32_0 = arith.constant 0 : i32
    %c0_i32_1 = arith.constant 0 : i32
    return %arg1, %c0_i32, %c0_i32_0 : i32, i32, i32
  }
  func.func @transform_9(%arg0: i32, %arg1: i32) -> (i32, i32, i32) {
    %c0_i32 = arith.constant 0 : i32
    %c0_i32_0 = arith.constant 0 : i32
    %c0_i32_1 = arith.constant 0 : i32
    return %arg1, %c0_i32, %c0_i32_0 : i32, i32, i32
  }
  func.func @transform_10(%arg0: i32, %arg1: i32) -> (i32, i32, i32) {
    %c0_i32 = arith.constant 0 : i32
    %c0_i32_0 = arith.constant 0 : i32
    %c0_i32_1 = arith.constant 0 : i32
    return %arg1, %c0_i32, %c0_i32_0 : i32, i32, i32
  }
  func.func @transform_11(%arg0: i32, %arg1: i32) -> (i32, i32, i32) {
    %c0_i32 = arith.constant 0 : i32
    %c0_i32_0 = arith.constant 0 : i32
    %c0_i32_1 = arith.constant 0 : i32
    return %arg1, %c0_i32, %c0_i32_0 : i32, i32, i32
  }
  func.func @transform_12(%arg0: i32, %arg1: i32) -> (i32, i32, i32) {
    %c0_i32 = arith.constant 0 : i32
    %c0_i32_0 = arith.constant 0 : i32
    %c0_i32_1 = arith.constant 0 : i32
    return %arg1, %c0_i32, %c0_i32_0 : i32, i32, i32
  }
  func.func @transform_13(%arg0: i32, %arg1: i32) -> (i32, i32, i32) {
    %c0_i32 = arith.constant 0 : i32
    %c0_i32_0 = arith.constant 0 : i32
    %c0_i32_1 = arith.constant 0 : i32
    return %arg1, %c0_i32, %c0_i32_0 : i32, i32, i32
  }
  func.func @transform_14(%arg0: i32, %arg1: i32) -> (i32, i32) {
    %c0_i32 = arith.constant 0 : i32
    %c0_i32_0 = arith.constant 0 : i32
    %c0_i32_1 = arith.constant 0 : i32
    return %c0_i32, %c0_i32_0 : i32, i32
  }
  func.func @transform_15(%arg0: i32, %arg1: i32) -> (i32, i32) {
    %c0_i32 = arith.constant 0 : i32
    %c0_i32_0 = arith.constant 0 : i32
    %c0_i32_1 = arith.constant 0 : i32
    return %c0_i32, %c0_i32_0 : i32, i32
  }
  func.func @transform_16(%arg0: i32, %arg1: i32) -> (i32, i32) {
    %c0_i32 = arith.constant 0 : i32
    %c0_i32_0 = arith.constant 0 : i32
    %c0_i32_1 = arith.constant 0 : i32
    return %c0_i32, %c0_i32_0 : i32, i32
  }
  func.func @transform_17(%arg0: i32, %arg1: i32) -> (i32, i32) {
    %c0_i32 = arith.constant 0 : i32
    %c0_i32_0 = arith.constant 0 : i32
    %c0_i32_1 = arith.constant 0 : i32
    return %c0_i32, %c0_i32_0 : i32, i32
  }
  func.func @transform_18(%arg0: i32, %arg1: i32) -> (i32, i32) {
    %c0_i32 = arith.constant 0 : i32
    %c0_i32_0 = arith.constant 0 : i32
    %c0_i32_1 = arith.constant 0 : i32
    return %c0_i32, %c0_i32_0 : i32, i32
  }
  func.func @transform_19(%arg0: i32, %arg1: i32) -> (i32, i32) {
    %c0_i32 = arith.constant 0 : i32
    %c0_i32_0 = arith.constant 0 : i32
    %c0_i32_1 = arith.constant 0 : i32
    return %c0_i32, %c0_i32_0 : i32, i32
  }
  func.func @transform_20(%arg0: i32, %arg1: i32) -> (i32, i32, i32) {
    %c0_i32 = arith.constant 0 : i32
    %c0_i32_0 = arith.constant 0 : i32
    %c0_i32_1 = arith.constant 0 : i32
    return %arg0, %c0_i32, %c0_i32_0 : i32, i32, i32
  }
}

</mosaic_0001>

<llo_original>
// kernel: transformer_forward.1
$region0: #{transformer_forward.1}
  #allocation0 [shape = 'u32[]', space=smem, size = 0x4, offset = 0x4, fixed_abs, tag = 'smem constant byte address 0x4 - core index']
  #allocation1 [shape = 'u32[72,128]{1,0:T(1,128)}', space=vmem, size = 0x9000, scoped, tag = 'internal scratch']
  #allocation2 [shape = 'f32[2,8,32]{2,1,0:T(8,128)}', space=vmem, size = 0x2000, scoped, tag = 'scratch operand']
  %s0 = inlined_call_operand.vmem [shape: f32[2,8,32], index: 0, kind: input, shape index: {}]
  %s1 = inlined_call_operand.vmem [shape: s32[2,8,8], index: 1, kind: input, shape index: {}]
  %s2 = inlined_call_operand.hbm [shape: bf16[4,6,32,32], index: 2, kind: input, shape index: {}]
  %s3 = inlined_call_operand.vmem [shape: f32[4,6,1,32], index: 3, kind: input, shape index: {}]
  %s4 = inlined_call_operand.vmem [shape: bf16[4,2,32,32], index: 4, kind: input, shape index: {}]
  %s5 = inlined_call_operand.vmem [shape: f32[4,1,32], index: 5, kind: input, shape index: {}]
  %s6 = inlined_call_operand.vmem [shape: f32[4,1,32], index: 6, kind: input, shape index: {}]
  %s7 = inlined_call_operand.vmem [shape: f32[4,1,32], index: 7, kind: input, shape index: {}]
  %s8 = inlined_call_operand.vmem [shape: bf16[4,32,128], index: 8, kind: input, shape index: {}]
  %s9 = inlined_call_operand.vmem [shape: f32[4,1,128], index: 9, kind: input, shape index: {}]
  %s10 = inlined_call_operand.vmem [shape: bf16[4,128,32], index: 10, kind: input, shape index: {}]
  %s11 = inlined_call_operand.vmem [shape: f32[4,1,32], index: 11, kind: input, shape index: {}]
  %s12 = inlined_call_operand.vmem [shape: f32[4,1,32], index: 12, kind: input, shape index: {}]
  %s13 = inlined_call_operand.vmem [shape: f32[4,1,32], index: 13, kind: input, shape index: {}]
  %s14 = inlined_call_operand.vmem [shape: f32[1,32], index: 14, kind: input, shape index: {}]
  %s15 = inlined_call_operand.vmem [shape: f32[1,32], index: 15, kind: input, shape index: {}]
  %s16 = inlined_call_operand.vmem [shape: f32[1,32], index: 16, kind: input, shape index: {}]
  %s17 = inlined_call_operand.vmem [shape: f32[1,32], index: 17, kind: input, shape index: {}]
  %s18 = inlined_call_operand.vmem [shape: bf16[32,32], index: 18, kind: input, shape index: {}]
  %s19 = inlined_call_operand.vmem [shape: f32[1,32], index: 19, kind: input, shape index: {}]
  %s20 = inlined_call_operand.hbm [shape: f32[2,8,32], index: 20, kind: output, shape index: {}]
  %s21 = sld [smem:[#allocation0]]
  $region133: #{transformer_forward.1} parent=0
    _
  %s23 = ssub.s32 1, %s21
  %s24 = scalar_select 0, %s23, %s21
  $region1: #{transformer_forward.1} parent=0
    #allocation3 [shape = 'u8[98304]{0}', space=vmem, size = 0x18000, scoped, tag = 'input window, operand 2']
    #allocation4 [shape = 's32[2]{0}', space=sflag, size = 0x8, scoped, tag = 'scoped memory for transformer_forward.1']
    #allocation5 [shape = 's32[2]{0}', space=sflag, size = 0x8, scoped, tag = 'scoped memory for transformer_forward.1']
    #allocation6 [shape = 'u8[8192]{0}', space=vmem, size = 0x2000, scoped, tag = 'output window, operand 0, single buffered']
    %25 = vsyncpa [#allocation4], 0
    %s26 = scalar_lea.sflag [#allocation4], 1
    %27 = vsyncpa %s26, 0
    %28 = vsyncpa [#allocation5], 0
    loop: start=0, step=1, limit=6
    $region2: #{transformer_forward.1} parent=1 // loop_pre_header
      _
    $region3: #{transformer_forward.1} parent=1 // loop_header
      %s30 = sphi 0, %s34
      %p31 = scmp.ge.s32.totalorder %s30, 6
      %s37 = sphi 0, %s49
      %s38 = sphi 0, %s45
      %s39 = sphi 0, %s37
      %s40 = sphi 0, %s38
      %s41 = sphi 0, %s39
      %s42 = sphi 0, %s40
      %s52 = sphi 0, %s54
      %s55 = sphi 0, %s52
      %s56 = sphi 0, %s55
      %s72 = sphi 0, %s56
      %s78 = sphi 0, %s80
      %s81 = sphi 0, %s78
      %s82 = sphi 0, %s81
      %s98 = sphi 0, %s82
      %s104 = sphi 0, %s106
      %s107 = sphi 0, %s104
      %s108 = sphi 0, %s107
      %s124 = sphi 0, %s108
      %s130 = sphi 0, %s132
      %s133 = sphi 0, %s130
      %s134 = sphi 0, %s133
      %s150 = sphi 0, %s134
      %s156 = sphi 0, %s158
      %s159 = sphi 0, %s156
      %s160 = sphi 0, %s159
      %s176 = sphi 0, %s160
      %s182 = sphi 0, %s184
      %s185 = sphi 0, %s182
      %s186 = sphi 0, %s185
      %s202 = sphi 0, %s186
      %s208 = sphi 0, %s210
      %s211 = sphi 0, %s208
      %s212 = sphi 0, %s211
      %s228 = sphi 0, %s212
      %s234 = sphi 0, %s236
      %s237 = sphi 0, %s234
      %s238 = sphi 0, %s237
      %s254 = sphi 0, %s238
      %s260 = sphi 0, %s262
      %s263 = sphi 0, %s260
      %s264 = sphi 0, %s263
      %s280 = sphi 0, %s264
      %s286 = sphi 0, %s288
      %s289 = sphi 0, %s286
      %s290 = sphi 0, %s289
      %s306 = sphi 0, %s290
      %s312 = sphi 0, %s314
      %s315 = sphi 0, %s312
      %s316 = sphi 0, %s315
      %s332 = sphi 0, %s316
      %s338 = sphi 0, %s340
      %s341 = sphi 0, %s338
      %s342 = sphi 0, %s341
      %s358 = sphi 0, %s342
      %s364 = sphi 0, %s366
      %s367 = sphi 0, %s364
      %s368 = sphi 0, %s367
      %s384 = sphi 0, %s368
      %s390 = sphi 0, %s392
      %s393 = sphi 0, %s390
      %s394 = sphi 0, %s393
      %s410 = sphi 0, %s394
      %s414 = sphi 0, %s414
      %s416 = sphi 0, %s414
      %s417 = sphi 0, %s416
      %s431 = sphi 0, %s417
      %s435 = sphi 0, %s435
      %s437 = sphi 0, %s435
      %s438 = sphi 0, %s437
      %s452 = sphi 0, %s438
      %s456 = sphi 0, %s456
      %s458 = sphi 0, %s456
      %s459 = sphi 0, %s458
      %s473 = sphi 0, %s459
      %s477 = sphi 0, %s477
      %s479 = sphi 0, %s477
      %s480 = sphi 0, %s479
      %s494 = sphi 0, %s480
      %s498 = sphi 0, %s498
      %s500 = sphi 0, %s498
      %s501 = sphi 0, %s500
      %s515 = sphi 0, %s501
      %s519 = sphi 0, %s519
      %s521 = sphi 0, %s519
      %s522 = sphi 0, %s521
      %s536 = sphi 0, %s522
      %s542 = sphi 0, %s544
      %s545 = sphi 0, %s542
      %s546 = sphi 0, %s545
      %s562 = sphi 0, %s546
    $region4: #{transformer_forward.1} parent=1 // loop_header_branch
      %33 = sbr.rel (%p31) target = $region8
    $region5: #{transformer_forward.1} parent=1 // loop_body
      %s35 = ssub.s32 %s30, 1
      %s36 = ssub.s32 %s30, 2
      %s43 = sadd.s32 1, %s38
      %p44 = scmp.ge.s32.totalorder %s43, 4
      %s45 = scalar_select %p44, 0, %s43
      %s46 = sadd.s32 1, %s37
      %s47 = scalar_select %p44, %s46, %s37
      %p48 = scmp.ge.s32.totalorder %s47, 1
      %s49 = scalar_select %p48, 0, %s47
      %s50 = ssub.s32 %s37, %s49
      %p51 = scmp.eq.s32.totalorder %s50, 0
      %s53 = sadd.s32 %s52, 1
      %s54 = scalar_select %p51, %s52, %s53
      %p57 = pneg %p51
      %p58 = scmp.eq.s32.totalorder %s30, 3
      %p59 = por %p57, %p58
      %p60 = scmp.ne.s32.totalorder %s52, %s55
      %p61 = scmp.eq.s32.totalorder %s30, 0
      %p62 = por %p60, %p61
      %p63 = scmp.ne.s32.totalorder %s52, %s55
      %p64 = scmp.eq.s32.totalorder %s35, 3
      %p65 = por %p63, %p64
      %p66 = scmp.ne.s32.totalorder %s55, %s56
      %p67 = scmp.eq.s32.totalorder %s35, 0
      %p68 = por %p66, %p67
      %p69 = scmp.ne.s32.totalorder %s55, %s56
      %p70 = scmp.eq.s32.totalorder %s36, 3
      %p71 = por %p69, %p70
      %p73 = scmp.ne.s32.totalorder %s56, %s72
      %p74 = scmp.eq.s32.totalorder %s36, 0
      %p75 = por %p73, %p74
      %s76 = ssub.s32 %s37, %s49
      %p77 = scmp.eq.s32.totalorder %s76, 0
      %s79 = sadd.s32 %s78, 1
      %s80 = scalar_select %p77, %s78, %s79
      %p83 = pneg %p77
      %p84 = scmp.eq.s32.totalorder %s30, 3
      %p85 = por %p83, %p84
      %p86 = scmp.ne.s32.totalorder %s78, %s81
      %p87 = scmp.eq.s32.totalorder %s30, 0
      %p88 = por %p86, %p87
      %p89 = scmp.ne.s32.totalorder %s78, %s81
      %p90 = scmp.eq.s32.totalorder %s35, 3
      %p91 = por %p89, %p90
      %p92 = scmp.ne.s32.totalorder %s81, %s82
      %p93 = scmp.eq.s32.totalorder %s35, 0
      %p94 = por %p92, %p93
      %p95 = scmp.ne.s32.totalorder %s81, %s82
      %p96 = scmp.eq.s32.totalorder %s36, 3
      %p97 = por %p95, %p96
      %p99 = scmp.ne.s32.totalorder %s82, %s98
      %p100 = scmp.eq.s32.totalorder %s36, 0
      %p101 = por %p99, %p100
      %s102 = ssub.s32 %s38, %s45
      %p103 = scmp.eq.s32.totalorder %s102, 0
      %s105 = sadd.s32 %s104, 1
      %s106 = scalar_select %p103, %s104, %s105
      %p109 = pneg %p103
      %p110 = scmp.eq.s32.totalorder %s30, 3
      %p111 = por %p109, %p110
      %p112 = scmp.ne.s32.totalorder %s104, %s107
      %p113 = scmp.eq.s32.totalorder %s30, 0
      %p114 = por %p112, %p113
      %p115 = scmp.ne.s32.totalorder %s104, %s107
      %p116 = scmp.eq.s32.totalorder %s35, 3
      %p117 = por %p115, %p116
      %p118 = scmp.ne.s32.totalorder %s107, %s108
      %p119 = scmp.eq.s32.totalorder %s35, 0
      %p120 = por %p118, %p119
      %p121 = scmp.ne.s32.totalorder %s107, %s108
      %p122 = scmp.eq.s32.totalorder %s36, 3
      %p123 = por %p121, %p122
      %p125 = scmp.ne.s32.totalorder %s108, %s124
      %p126 = scmp.eq.s32.totalorder %s36, 0
      %p127 = por %p125, %p126
      %s128 = ssub.s32 %s38, %s45
      %p129 = scmp.eq.s32.totalorder %s128, 0
      %s131 = sadd.s32 %s130, 1
      %s132 = scalar_select %p129, %s130, %s131
      %p135 = pneg %p129
      %p136 = scmp.eq.s32.totalorder %s30, 3
      %p137 = por %p135, %p136
      %p138 = scmp.ne.s32.totalorder %s130, %s133
      %p139 = scmp.eq.s32.totalorder %s30, 0
      %p140 = por %p138, %p139
      %p141 = scmp.ne.s32.totalorder %s130, %s133
      %p142 = scmp.eq.s32.totalorder %s35, 3
      %p143 = por %p141, %p142
      %p144 = scmp.ne.s32.totalorder %s133, %s134
      %p145 = scmp.eq.s32.totalorder %s35, 0
      %p146 = por %p144, %p145
      %p147 = scmp.ne.s32.totalorder %s133, %s134
      %p148 = scmp.eq.s32.totalorder %s36, 3
      %p149 = por %p147, %p148
      %p151 = scmp.ne.s32.totalorder %s134, %s150
      %p152 = scmp.eq.s32.totalorder %s36, 0
      %p153 = por %p151, %p152
      %s154 = ssub.s32 %s38, %s45
      %p155 = scmp.eq.s32.totalorder %s154, 0
      %s157 = sadd.s32 %s156, 1
      %s158 = scalar_select %p155, %s156, %s157
      %p161 = pneg %p155
      %p162 = scmp.eq.s32.totalorder %s30, 3
      %p163 = por %p161, %p162
      %p164 = scmp.ne.s32.totalorder %s156, %s159
      %p165 = scmp.eq.s32.totalorder %s30, 0
      %p166 = por %p164, %p165
      %p167 = scmp.ne.s32.totalorder %s156, %s159
      %p168 = scmp.eq.s32.totalorder %s35, 3
      %p169 = por %p167, %p168
      %p170 = scmp.ne.s32.totalorder %s159, %s160
      %p171 = scmp.eq.s32.totalorder %s35, 0
      %p172 = por %p170, %p171
      %p173 = scmp.ne.s32.totalorder %s159, %s160
      %p174 = scmp.eq.s32.totalorder %s36, 3
      %p175 = por %p173, %p174
      %p177 = scmp.ne.s32.totalorder %s160, %s176
      %p178 = scmp.eq.s32.totalorder %s36, 0
      %p179 = por %p177, %p178
      %s180 = ssub.s32 %s38, %s45
      %p181 = scmp.eq.s32.totalorder %s180, 0
      %s183 = sadd.s32 %s182, 1
      %s184 = scalar_select %p181, %s182, %s183
      %p187 = pneg %p181
      %p188 = scmp.eq.s32.totalorder %s30, 3
      %p189 = por %p187, %p188
      %p190 = scmp.ne.s32.totalorder %s182, %s185
      %p191 = scmp.eq.s32.totalorder %s30, 0
      %p192 = por %p190, %p191
      %p193 = scmp.ne.s32.totalorder %s182, %s185
      %p194 = scmp.eq.s32.totalorder %s35, 3
      %p195 = por %p193, %p194
      %p196 = scmp.ne.s32.totalorder %s185, %s186
      %p197 = scmp.eq.s32.totalorder %s35, 0
      %p198 = por %p196, %p197
      %p199 = scmp.ne.s32.totalorder %s185, %s186
      %p200 = scmp.eq.s32.totalorder %s36, 3
      %p201 = por %p199, %p200
      %p203 = scmp.ne.s32.totalorder %s186, %s202
      %p204 = scmp.eq.s32.totalorder %s36, 0
      %p205 = por %p203, %p204
      %s206 = ssub.s32 %s38, %s45
      %p207 = scmp.eq.s32.totalorder %s206, 0
      %s209 = sadd.s32 %s208, 1
      %s210 = scalar_select %p207, %s208, %s209
      %p213 = pneg %p207
      %p214 = scmp.eq.s32.totalorder %s30, 3
      %p215 = por %p213, %p214
      %p216 = scmp.ne.s32.totalorder %s208, %s211
      %p217 = scmp.eq.s32.totalorder %s30, 0
      %p218 = por %p216, %p217
      %p219 = scmp.ne.s32.totalorder %s208, %s211
      %p220 = scmp.eq.s32.totalorder %s35, 3
      %p221 = por %p219, %p220
      %p222 = scmp.ne.s32.totalorder %s211, %s212
      %p223 = scmp.eq.s32.totalorder %s35, 0
      %p224 = por %p222, %p223
      %p225 = scmp.ne.s32.totalorder %s211, %s212
      %p226 = scmp.eq.s32.totalorder %s36, 3
      %p227 = por %p225, %p226
      %p229 = scmp.ne.s32.totalorder %s212, %s228
      %p230 = scmp.eq.s32.totalorder %s36, 0
      %p231 = por %p229, %p230
      %s232 = ssub.s32 %s38, %s45
      %p233 = scmp.eq.s32.totalorder %s232, 0
      %s235 = sadd.s32 %s234, 1
      %s236 = scalar_select %p233, %s234, %s235
      %p239 = pneg %p233
      %p240 = scmp.eq.s32.totalorder %s30, 3
      %p241 = por %p239, %p240
      %p242 = scmp.ne.s32.totalorder %s234, %s237
      %p243 = scmp.eq.s32.totalorder %s30, 0
      %p244 = por %p242, %p243
      %p245 = scmp.ne.s32.totalorder %s234, %s237
      %p246 = scmp.eq.s32.totalorder %s35, 3
      %p247 = por %p245, %p246
      %p248 = scmp.ne.s32.totalorder %s237, %s238
      %p249 = scmp.eq.s32.totalorder %s35, 0
      %p250 = por %p248, %p249
      %p251 = scmp.ne.s32.totalorder %s237, %s238
      %p252 = scmp.eq.s32.totalorder %s36, 3
      %p253 = por %p251, %p252
      %p255 = scmp.ne.s32.totalorder %s238, %s254
      %p256 = scmp.eq.s32.totalorder %s36, 0
      %p257 = por %p255, %p256
      %s258 = ssub.s32 %s38, %s45
      %p259 = scmp.eq.s32.totalorder %s258, 0
      %s261 = sadd.s32 %s260, 1
      %s262 = scalar_select %p259, %s260, %s261
      %p265 = pneg %p259
      %p266 = scmp.eq.s32.totalorder %s30, 3
      %p267 = por %p265, %p266
      %p268 = scmp.ne.s32.totalorder %s260, %s263
      %p269 = scmp.eq.s32.totalorder %s30, 0
      %p270 = por %p268, %p269
      %p271 = scmp.ne.s32.totalorder %s260, %s263
      %p272 = scmp.eq.s32.totalorder %s35, 3
      %p273 = por %p271, %p272
      %p274 = scmp.ne.s32.totalorder %s263, %s264
      %p275 = scmp.eq.s32.totalorder %s35, 0
      %p276 = por %p274, %p275
      %p277 = scmp.ne.s32.totalorder %s263, %s264
      %p278 = scmp.eq.s32.totalorder %s36, 3
      %p279 = por %p277, %p278
      %p281 = scmp.ne.s32.totalorder %s264, %s280
      %p282 = scmp.eq.s32.totalorder %s36, 0
      %p283 = por %p281, %p282
      %s284 = ssub.s32 %s38, %s45
      %p285 = scmp.eq.s32.totalorder %s284, 0
      %s287 = sadd.s32 %s286, 1
      %s288 = scalar_select %p285, %s286, %s287
      %p291 = pneg %p285
      %p292 = scmp.eq.s32.totalorder %s30, 3
      %p293 = por %p291, %p292
      %p294 = scmp.ne.s32.totalorder %s286, %s289
      %p295 = scmp.eq.s32.totalorder %s30, 0
      %p296 = por %p294, %p295
      %p297 = scmp.ne.s32.totalorder %s286, %s289
      %p298 = scmp.eq.s32.totalorder %s35, 3
      %p299 = por %p297, %p298
      %p300 = scmp.ne.s32.totalorder %s289, %s290
      %p301 = scmp.eq.s32.totalorder %s35, 0
      %p302 = por %p300, %p301
      %p303 = scmp.ne.s32.totalorder %s289, %s290
      %p304 = scmp.eq.s32.totalorder %s36, 3
      %p305 = por %p303, %p304
      %p307 = scmp.ne.s32.totalorder %s290, %s306
      %p308 = scmp.eq.s32.totalorder %s36, 0
      %p309 = por %p307, %p308
      %s310 = ssub.s32 %s38, %s45
      %p311 = scmp.eq.s32.totalorder %s310, 0
      %s313 = sadd.s32 %s312, 1
      %s314 = scalar_select %p311, %s312, %s313
      %p317 = pneg %p311
      %p318 = scmp.eq.s32.totalorder %s30, 3
      %p319 = por %p317, %p318
      %p320 = scmp.ne.s32.totalorder %s312, %s315
      %p321 = scmp.eq.s32.totalorder %s30, 0
      %p322 = por %p320, %p321
      %p323 = scmp.ne.s32.totalorder %s312, %s315
      %p324 = scmp.eq.s32.totalorder %s35, 3
      %p325 = por %p323, %p324
      %p326 = scmp.ne.s32.totalorder %s315, %s316
      %p327 = scmp.eq.s32.totalorder %s35, 0
      %p328 = por %p326, %p327
      %p329 = scmp.ne.s32.totalorder %s315, %s316
      %p330 = scmp.eq.s32.totalorder %s36, 3
      %p331 = por %p329, %p330
      %p333 = scmp.ne.s32.totalorder %s316, %s332
      %p334 = scmp.eq.s32.totalorder %s36, 0
      %p335 = por %p333, %p334
      %s336 = ssub.s32 %s38, %s45
      %p337 = scmp.eq.s32.totalorder %s336, 0
      %s339 = sadd.s32 %s338, 1
      %s340 = scalar_select %p337, %s338, %s339
      %p343 = pneg %p337
      %p344 = scmp.eq.s32.totalorder %s30, 3
      %p345 = por %p343, %p344
      %p346 = scmp.ne.s32.totalorder %s338, %s341
      %p347 = scmp.eq.s32.totalorder %s30, 0
      %p348 = por %p346, %p347
      %p349 = scmp.ne.s32.totalorder %s338, %s341
      %p350 = scmp.eq.s32.totalorder %s35, 3
      %p351 = por %p349, %p350
      %p352 = scmp.ne.s32.totalorder %s341, %s342
      %p353 = scmp.eq.s32.totalorder %s35, 0
      %p354 = por %p352, %p353
      %p355 = scmp.ne.s32.totalorder %s341, %s342
      %p356 = scmp.eq.s32.totalorder %s36, 3
      %p357 = por %p355, %p356
      %p359 = scmp.ne.s32.totalorder %s342, %s358
      %p360 = scmp.eq.s32.totalorder %s36, 0
      %p361 = por %p359, %p360
      %s362 = ssub.s32 %s38, %s45
      %p363 = scmp.eq.s32.totalorder %s362, 0
      %s365 = sadd.s32 %s364, 1
      %s366 = scalar_select %p363, %s364, %s365
      %p369 = pneg %p363
      %p370 = scmp.eq.s32.totalorder %s30, 3
      %p371 = por %p369, %p370
      %p372 = scmp.ne.s32.totalorder %s364, %s367
      %p373 = scmp.eq.s32.totalorder %s30, 0
      %p374 = por %p372, %p373
      %p375 = scmp.ne.s32.totalorder %s364, %s367
      %p376 = scmp.eq.s32.totalorder %s35, 3
      %p377 = por %p375, %p376
      %p378 = scmp.ne.s32.totalorder %s367, %s368
      %p379 = scmp.eq.s32.totalorder %s35, 0
      %p380 = por %p378, %p379
      %p381 = scmp.ne.s32.totalorder %s367, %s368
      %p382 = scmp.eq.s32.totalorder %s36, 3
      %p383 = por %p381, %p382
      %p385 = scmp.ne.s32.totalorder %s368, %s384
      %p386 = scmp.eq.s32.totalorder %s36, 0
      %p387 = por %p385, %p386
      %s388 = ssub.s32 %s38, %s45
      %p389 = scmp.eq.s32.totalorder %s388, 0
      %s391 = sadd.s32 %s390, 1
      %s392 = scalar_select %p389, %s390, %s391
      %p395 = pneg %p389
      %p396 = scmp.eq.s32.totalorder %s30, 3
      %p397 = por %p395, %p396
      %p398 = scmp.ne.s32.totalorder %s390, %s393
      %p399 = scmp.eq.s32.totalorder %s30, 0
      %p400 = por %p398, %p399
      %p401 = scmp.ne.s32.totalorder %s390, %s393
      %p402 = scmp.eq.s32.totalorder %s35, 3
      %p403 = por %p401, %p402
      %p404 = scmp.ne.s32.totalorder %s393, %s394
      %p405 = scmp.eq.s32.totalorder %s35, 0
      %p406 = por %p404, %p405
      %p407 = scmp.ne.s32.totalorder %s393, %s394
      %p408 = scmp.eq.s32.totalorder %s36, 3
      %p409 = por %p407, %p408
      %p411 = scmp.ne.s32.totalorder %s394, %s410
      %p412 = scmp.eq.s32.totalorder %s36, 0
      %p413 = por %p411, %p412
      %s415 = sadd.s32 %s414, 1
      %p418 = scmp.eq.s32.totalorder %s30, 3
      %p419 = scmp.ne.s32.totalorder %s414, %s416
      %p420 = scmp.eq.s32.totalorder %s30, 0
      %p421 = por %p419, %p420
      %p422 = scmp.ne.s32.totalorder %s414, %s416
      %p423 = scmp.eq.s32.totalorder %s35, 3
      %p424 = por %p422, %p423
      %p425 = scmp.ne.s32.totalorder %s416, %s417
      %p426 = scmp.eq.s32.totalorder %s35, 0
      %p427 = por %p425, %p426
      %p428 = scmp.ne.s32.totalorder %s416, %s417
      %p429 = scmp.eq.s32.totalorder %s36, 3
      %p430 = por %p428, %p429
      %p432 = scmp.ne.s32.totalorder %s417, %s431
      %p433 = scmp.eq.s32.totalorder %s36, 0
      %p434 = por %p432, %p433
      %s436 = sadd.s32 %s435, 1
      %p439 = scmp.eq.s32.totalorder %s30, 3
      %p440 = scmp.ne.s32.totalorder %s435, %s437
      %p441 = scmp.eq.s32.totalorder %s30, 0
      %p442 = por %p440, %p441
      %p443 = scmp.ne.s32.totalorder %s435, %s437
      %p444 = scmp.eq.s32.totalorder %s35, 3
      %p445 = por %p443, %p444
      %p446 = scmp.ne.s32.totalorder %s437, %s438
      %p447 = scmp.eq.s32.totalorder %s35, 0
      %p448 = por %p446, %p447
      %p449 = scmp.ne.s32.totalorder %s437, %s438
      %p450 = scmp.eq.s32.totalorder %s36, 3
      %p451 = por %p449, %p450
      %p453 = scmp.ne.s32.totalorder %s438, %s452
      %p454 = scmp.eq.s32.totalorder %s36, 0
      %p455 = por %p453, %p454
      %s457 = sadd.s32 %s456, 1
      %p460 = scmp.eq.s32.totalorder %s30, 3
      %p461 = scmp.ne.s32.totalorder %s456, %s458
      %p462 = scmp.eq.s32.totalorder %s30, 0
      %p463 = por %p461, %p462
      %p464 = scmp.ne.s32.totalorder %s456, %s458
      %p465 = scmp.eq.s32.totalorder %s35, 3
      %p466 = por %p464, %p465
      %p467 = scmp.ne.s32.totalorder %s458, %s459
      %p468 = scmp.eq.s32.totalorder %s35, 0
      %p469 = por %p467, %p468
      %p470 = scmp.ne.s32.totalorder %s458, %s459
      %p471 = scmp.eq.s32.totalorder %s36, 3
      %p472 = por %p470, %p471
      %p474 = scmp.ne.s32.totalorder %s459, %s473
      %p475 = scmp.eq.s32.totalorder %s36, 0
      %p476 = por %p474, %p475
      %s478 = sadd.s32 %s477, 1
      %p481 = scmp.eq.s32.totalorder %s30, 3
      %p482 = scmp.ne.s32.totalorder %s477, %s479
      %p483 = scmp.eq.s32.totalorder %s30, 0
      %p484 = por %p482, %p483
      %p485 = scmp.ne.s32.totalorder %s477, %s479
      %p486 = scmp.eq.s32.totalorder %s35, 3
      %p487 = por %p485, %p486
      %p488 = scmp.ne.s32.totalorder %s479, %s480
      %p489 = scmp.eq.s32.totalorder %s35, 0
      %p490 = por %p488, %p489
      %p491 = scmp.ne.s32.totalorder %s479, %s480
      %p492 = scmp.eq.s32.totalorder %s36, 3
      %p493 = por %p491, %p492
      %p495 = scmp.ne.s32.totalorder %s480, %s494
      %p496 = scmp.eq.s32.totalorder %s36, 0
      %p497 = por %p495, %p496
      %s499 = sadd.s32 %s498, 1
      %p502 = scmp.eq.s32.totalorder %s30, 3
      %p503 = scmp.ne.s32.totalorder %s498, %s500
      %p504 = scmp.eq.s32.totalorder %s30, 0
      %p505 = por %p503, %p504
      %p506 = scmp.ne.s32.totalorder %s498, %s500
      %p507 = scmp.eq.s32.totalorder %s35, 3
      %p508 = por %p506, %p507
      %p509 = scmp.ne.s32.totalorder %s500, %s501
      %p510 = scmp.eq.s32.totalorder %s35, 0
      %p511 = por %p509, %p510
      %p512 = scmp.ne.s32.totalorder %s500, %s501
      %p513 = scmp.eq.s32.totalorder %s36, 3
      %p514 = por %p512, %p513
      %p516 = scmp.ne.s32.totalorder %s501, %s515
      %p517 = scmp.eq.s32.totalorder %s36, 0
      %p518 = por %p516, %p517
      %s520 = sadd.s32 %s519, 1
      %p523 = scmp.eq.s32.totalorder %s30, 3
      %p524 = scmp.ne.s32.totalorder %s519, %s521
      %p525 = scmp.eq.s32.totalorder %s30, 0
      %p526 = por %p524, %p525
      %p527 = scmp.ne.s32.totalorder %s519, %s521
      %p528 = scmp.eq.s32.totalorder %s35, 3
      %p529 = por %p527, %p528
      %p530 = scmp.ne.s32.totalorder %s521, %s522
      %p531 = scmp.eq.s32.totalorder %s35, 0
      %p532 = por %p530, %p531
      %p533 = scmp.ne.s32.totalorder %s521, %s522
      %p534 = scmp.eq.s32.totalorder %s36, 3
      %p535 = por %p533, %p534
      %p537 = scmp.ne.s32.totalorder %s522, %s536
      %p538 = scmp.eq.s32.totalorder %s36, 0
      %p539 = por %p537, %p538
      %s540 = ssub.s32 %s37, %s49
      %p541 = scmp.eq.s32.totalorder %s540, 0
      %s543 = sadd.s32 %s542, 1
      %s544 = scalar_select %p541, %s542, %s543
      %p547 = pneg %p541
      %p548 = scmp.eq.s32.totalorder %s30, 3
      %p549 = por %p547, %p548
      %p550 = scmp.ne.s32.totalorder %s542, %s545
      %p551 = scmp.eq.s32.totalorder %s30, 0
      %p552 = por %p550, %p551
      %p553 = scmp.ne.s32.totalorder %s542, %s545
      %p554 = scmp.eq.s32.totalorder %s35, 3
      %p555 = por %p553, %p554
      %p556 = scmp.ne.s32.totalorder %s545, %s546
      %p557 = scmp.eq.s32.totalorder %s35, 0
      %p558 = por %p556, %p557
      %p559 = scmp.ne.s32.totalorder %s545, %s546
      %p560 = scmp.eq.s32.totalorder %s36, 3
      %p561 = por %p559, %p560
      %p563 = scmp.ne.s32.totalorder %s546, %s562
      %p564 = scmp.eq.s32.totalorder %s36, 0
      %p565 = por %p563, %p564
      %p566 = scmp.le.s32.totalorder 1, %s30
      %p567 = scmp.lt.s32.totalorder %s30, 5
      %p568 = pnand %p566, %p567
      %p569 = pneg %p568
      // Predicated region
      $region9: #{transformer_forward.1} parent=5 // pred_check
        _
      $region10: #{transformer_forward.1} parent=5 // pred_check_branch
        %571 = sbr.rel (%p568) target = $region12
      $region11: #{transformer_forward.1} parent=5 // pred_region
        %s572 = ssub.s32 %s30, 1
        // Predicated region
        $region13: #{transformer_forward.1} parent=11 // pred_check
          %p573 = pneg %p68
        $region14: #{transformer_forward.1} parent=11 // pred_check_branch
          %575 = sbr.rel (%p573) target = $region16
        $region15: #{transformer_forward.1} parent=11 // pred_region
          %s576 = smul.u32 2, %s39
          %p577 = scmp.lt.s32.totalorder %s576, 1
          %s578 = scalar_select %p577, %s576, 1
          %s579 = smul.addr %s578, 8
          %s580 = scalar_lea.vmem %s0, %s579
          %s581 = smul.u32 2, %s39
        $region16: #{transformer_forward.1} parent=11 // pred_fallthru
          _
        // Predicated region
        $region17: #{transformer_forward.1} parent=11 // pred_check
          %p582 = pneg %p94
        $region18: #{transformer_forward.1} parent=11 // pred_check_branch
          %584 = sbr.rel (%p582) target = $region20
        $region19: #{transformer_forward.1} parent=11 // pred_region
          %s585 = smul.u32 2, %s39
          %p586 = scmp.lt.s32.totalorder %s585, 1
          %s587 = scalar_select %p586, %s585, 1
          %s588 = smul.addr %s587, 8
          %s589 = scalar_lea.vmem %s1, %s588
          %s590 = smul.u32 2, %s39
        $region20: #{transformer_forward.1} parent=11 // pred_fallthru
          _
        // Predicated region
        $region21: #{transformer_forward.1} parent=11 // pred_check
          %p591 = pneg %p427
        $region22: #{transformer_forward.1} parent=11 // pred_check_branch
          %593 = sbr.rel (%p591) target = $region24
        $region23: #{transformer_forward.1} parent=11 // pred_region
          _
        $region24: #{transformer_forward.1} parent=11 // pred_fallthru
          _
        // Predicated region
        $region25: #{transformer_forward.1} parent=11 // pred_check
          %p594 = pneg %p448
        $region26: #{transformer_forward.1} parent=11 // pred_check_branch
          %596 = sbr.rel (%p594) target = $region28
        $region27: #{transformer_forward.1} parent=11 // pred_region
          _
        $region28: #{transformer_forward.1} parent=11 // pred_fallthru
          _
        // Predicated region
        $region29: #{transformer_forward.1} parent=11 // pred_check
          %p597 = pneg %p469
        $region30: #{transformer_forward.1} parent=11 // pred_check_branch
          %599 = sbr.rel (%p597) target = $region32
        $region31: #{transformer_forward.1} parent=11 // pred_region
          _
        $region32: #{transformer_forward.1} parent=11 // pred_fallthru
          _
        // Predicated region
        $region33: #{transformer_forward.1} parent=11 // pred_check
          %p600 = pneg %p490
        $region34: #{transformer_forward.1} parent=11 // pred_check_branch
          %602 = sbr.rel (%p600) target = $region36
        $region35: #{transformer_forward.1} parent=11 // pred_region
          _
        $region36: #{transformer_forward.1} parent=11 // pred_fallthru
          _
        // Predicated region
        $region37: #{transformer_forward.1} parent=11 // pred_check
          %p603 = pneg %p511
        $region38: #{transformer_forward.1} parent=11 // pred_check_branch
          %605 = sbr.rel (%p603) target = $region40
        $region39: #{transformer_forward.1} parent=11 // pred_region
          _
        $region40: #{transformer_forward.1} parent=11 // pred_fallthru
          _
        // Predicated region
        $region41: #{transformer_forward.1} parent=11 // pred_check
          %p606 = pneg %p532
        $region42: #{transformer_forward.1} parent=11 // pred_check_branch
          %608 = sbr.rel (%p606) target = $region44
        $region43: #{transformer_forward.1} parent=11 // pred_region
          _
        $region44: #{transformer_forward.1} parent=11 // pred_fallthru
          _
      $region12: #{transformer_forward.1} parent=5 // pred_fallthru
        _
      %p609 = scmp.lt.s32.totalorder %s30, 4
      // Predicated region
      $region45: #{transformer_forward.1} parent=5 // pred_check
        %p610 = pneg %p609
      $region46: #{transformer_forward.1} parent=5 // pred_check_branch
        %612 = sbr.rel (%p610) target = $region48
      $region47: #{transformer_forward.1} parent=5 // pred_region
        // Predicated region
        $region49: #{transformer_forward.1} parent=47 // pred_check
          %p613 = pneg %p114
        $region50: #{transformer_forward.1} parent=47 // pred_check_branch
          %615 = sbr.rel (%p613) target = $region52
        $region51: #{transformer_forward.1} parent=47 // pred_region
          %s616 = sand.u32 %s104, 1
          %s617 = scalar_lea.sflag [#allocation4], %s616
          %s618 = sand.u32 %s104, 1
          %s619 = smul.addr %s618, 96
          %s620 = scalar_lea.vmem [#allocation3], %s619
          %622 = vsyncadd %s617, 0
          %s623 = smul.addr %s38, 24
          %s624 = smul.addr %s623, 4
          %s625 = scalar_lea.hbm %s2, %s624
          %s626 = sshll.u32 %s625, 4
          %s627 = int_to_ptr.hbm [resolvable:$true] %s626
          %s628 = sshll.u32 %s620, 4
          %s629 = int_to_ptr.vmem [resolvable:$true] %s628
          %634 = dma.hbm_to_vmem [thread:$0]  %s627, 1536, %s629, %s617, 64, 64, 4
        $region52: #{transformer_forward.1} parent=47 // pred_fallthru
          _
        // Predicated region
        $region53: #{transformer_forward.1} parent=47 // pred_check
          %p635 = pneg %p140
        $region54: #{transformer_forward.1} parent=47 // pred_check_branch
          %637 = sbr.rel (%p635) target = $region56
        $region55: #{transformer_forward.1} parent=47 // pred_region
          %p638 = scmp.lt.s32.totalorder %s38, 3
          %s639 = scalar_select %p638, %s38, 3
          %s640 = smul.addr %s639, 6
          %s641 = scalar_lea.vmem %s3, %s640
        $region56: #{transformer_forward.1} parent=47 // pred_fallthru
          _
        // Predicated region
        $region57: #{transformer_forward.1} parent=47 // pred_check
          %p642 = pneg %p166
        $region58: #{transformer_forward.1} parent=47 // pred_check_branch
          %644 = sbr.rel (%p642) target = $region60
        $region59: #{transformer_forward.1} parent=47 // pred_region
          %p645 = scmp.lt.s32.totalorder %s38, 3
          %s646 = scalar_select %p645, %s38, 3
          %s647 = smul.addr %s646, 8
          %s648 = smul.addr %s647, 4
          %s649 = scalar_lea.vmem %s4, %s648
        $region60: #{transformer_forward.1} parent=47 // pred_fallthru
          _
        // Predicated region
        $region61: #{transformer_forward.1} parent=47 // pred_check
          %p650 = pneg %p192
        $region62: #{transformer_forward.1} parent=47 // pred_check_branch
          %652 = sbr.rel (%p650) target = $region64
        $region63: #{transformer_forward.1} parent=47 // pred_region
          %p653 = scmp.lt.s32.totalorder %s38, 3
          %s654 = scalar_select %p653, %s38, 3
          %s655 = scalar_lea.vmem %s5, %s654
        $region64: #{transformer_forward.1} parent=47 // pred_fallthru
          _
        // Predicated region
        $region65: #{transformer_forward.1} parent=47 // pred_check
          %p656 = pneg %p218
        $region66: #{transformer_forward.1} parent=47 // pred_check_branch
          %658 = sbr.rel (%p656) target = $region68
        $region67: #{transformer_forward.1} parent=47 // pred_region
          %p659 = scmp.lt.s32.totalorder %s38, 3
          %s660 = scalar_select %p659, %s38, 3
          %s661 = scalar_lea.vmem %s6, %s660
        $region68: #{transformer_forward.1} parent=47 // pred_fallthru
          _
        // Predicated region
        $region69: #{transformer_forward.1} parent=47 // pred_check
          %p662 = pneg %p244
        $region70: #{transformer_forward.1} parent=47 // pred_check_branch
          %664 = sbr.rel (%p662) target = $region72
        $region71: #{transformer_forward.1} parent=47 // pred_region
          %p665 = scmp.lt.s32.totalorder %s38, 3
          %s666 = scalar_select %p665, %s38, 3
          %s667 = scalar_lea.vmem %s7, %s666
        $region72: #{transformer_forward.1} parent=47 // pred_fallthru
          _
        // Predicated region
        $region73: #{transformer_forward.1} parent=47 // pred_check
          %p668 = pneg %p270
        $region74: #{transformer_forward.1} parent=47 // pred_check_branch
          %670 = sbr.rel (%p668) target = $region76
        $region75: #{transformer_forward.1} parent=47 // pred_region
          %p671 = scmp.lt.s32.totalorder %s38, 3
          %s672 = scalar_select %p671, %s38, 3
          %s673 = smul.addr %s672, 4
          %s674 = smul.addr %s673, 4
          %s675 = scalar_lea.vmem %s8, %s674
        $region76: #{transformer_forward.1} parent=47 // pred_fallthru
          _
        // Predicated region
        $region77: #{transformer_forward.1} parent=47 // pred_check
          %p676 = pneg %p296
        $region78: #{transformer_forward.1} parent=47 // pred_check_branch
          %678 = sbr.rel (%p676) target = $region80
        $region79: #{transformer_forward.1} parent=47 // pred_region
          %p679 = scmp.lt.s32.totalorder %s38, 3
          %s680 = scalar_select %p679, %s38, 3
          %s681 = scalar_lea.vmem %s9, %s680
        $region80: #{transformer_forward.1} parent=47 // pred_fallthru
          _
        // Predicated region
        $region81: #{transformer_forward.1} parent=47 // pred_check
          %p682 = pneg %p322
        $region82: #{transformer_forward.1} parent=47 // pred_check_branch
          %684 = sbr.rel (%p682) target = $region84
        $region83: #{transformer_forward.1} parent=47 // pred_region
          %p685 = scmp.lt.s32.totalorder %s38, 3
          %s686 = scalar_select %p685, %s38, 3
          %s687 = smul.addr %s686, 16
          %s688 = smul.addr %s687, 4
          %s689 = scalar_lea.vmem %s10, %s688
        $region84: #{transformer_forward.1} parent=47 // pred_fallthru
          _
        // Predicated region
        $region85: #{transformer_forward.1} parent=47 // pred_check
          %p690 = pneg %p348
        $region86: #{transformer_forward.1} parent=47 // pred_check_branch
          %692 = sbr.rel (%p690) target = $region88
        $region87: #{transformer_forward.1} parent=47 // pred_region
          %p693 = scmp.lt.s32.totalorder %s38, 3
          %s694 = scalar_select %p693, %s38, 3
          %s695 = scalar_lea.vmem %s11, %s694
        $region88: #{transformer_forward.1} parent=47 // pred_fallthru
          _
        // Predicated region
        $region89: #{transformer_forward.1} parent=47 // pred_check
          %p696 = pneg %p374
        $region90: #{transformer_forward.1} parent=47 // pred_check_branch
          %698 = sbr.rel (%p696) target = $region92
        $region91: #{transformer_forward.1} parent=47 // pred_region
          %p699 = scmp.lt.s32.totalorder %s38, 3
          %s700 = scalar_select %p699, %s38, 3
          %s701 = scalar_lea.vmem %s12, %s700
        $region92: #{transformer_forward.1} parent=47 // pred_fallthru
          _
        // Predicated region
        $region93: #{transformer_forward.1} parent=47 // pred_check
          %p702 = pneg %p400
        $region94: #{transformer_forward.1} parent=47 // pred_check_branch
          %704 = sbr.rel (%p702) target = $region96
        $region95: #{transformer_forward.1} parent=47 // pred_region
          %p705 = scmp.lt.s32.totalorder %s38, 3
          %s706 = scalar_select %p705, %s38, 3
          %s707 = scalar_lea.vmem %s13, %s706
        $region96: #{transformer_forward.1} parent=47 // pred_fallthru
          _
      $region48: #{transformer_forward.1} parent=5 // pred_fallthru
        _
      %p708 = scmp.le.s32.totalorder 1, %s30
      %p709 = scmp.lt.s32.totalorder %s30, 5
      %p710 = pnand %p708, %p709
      %p711 = pneg %p710
      // Predicated region
      $region97: #{transformer_forward.1} parent=5 // pred_check
        _
      $region98: #{transformer_forward.1} parent=5 // pred_check_branch
        %713 = sbr.rel (%p710) target = $region100
      $region99: #{transformer_forward.1} parent=5 // pred_region
        %s714 = ssub.s32 %s30, 1
        %s715 = sand.u32 %s107, 1
        %s716 = scalar_lea.sflag [#allocation4], %s715
        %s717 = sand.u32 %s107, 1
        %s718 = smul.addr %s717, 96
        %s719 = scalar_lea.vmem [#allocation3], %s718
        // Predicated region
        $region101: #{transformer_forward.1} parent=99 // pred_check
          %p720 = pneg %p120
        $region102: #{transformer_forward.1} parent=99 // pred_check_branch
          %722 = sbr.rel (%p720) target = $region104
        $region103: #{transformer_forward.1} parent=99 // pred_region
          %724 = dma.done %s716, 1536
        $region104: #{transformer_forward.1} parent=99 // pred_fallthru
          _
        %s725 = smul.u32 2, %s39
        %p726 = scmp.lt.s32.totalorder %s725, 1
        %s727 = scalar_select %p726, %s725, 1
        %s728 = smul.addr %s727, 8
        %s729 = scalar_lea.vmem %s0, %s728
        %p730 = pneg %p68
        %p731 = pneg %p65
        %s732 = smul.u32 2, %s39
        %p733 = scmp.lt.s32.totalorder %s732, 1
        %s734 = scalar_select %p733, %s732, 1
        %s735 = smul.addr %s734, 8
        %s736 = scalar_lea.vmem %s1, %s735
        %p737 = pneg %p94
        %p738 = pneg %p91
        %s739 = sand.u32 %s107, 1
        %s740 = scalar_lea.sflag [#allocation4], %s739
        %s741 = sand.u32 %s107, 1
        %s742 = smul.addr %s741, 96
        %s743 = scalar_lea.vmem [#allocation3], %s742
        %p744 = pneg %p120
        %p745 = pneg %p117
        %p746 = scmp.lt.s32.totalorder %s40, 3
        %s747 = scalar_select %p746, %s40, 3
        %s748 = smul.addr %s747, 6
        %s749 = scalar_lea.vmem %s3, %s748
        %p750 = pneg %p146
        %p751 = pneg %p143
        %p752 = scmp.lt.s32.totalorder %s40, 3
        %s753 = scalar_select %p752, %s40, 3
        %s754 = smul.addr %s753, 8
        %s755 = smul.addr %s754, 4
        %s756 = scalar_lea.vmem %s4, %s755
        %p757 = pneg %p172
        %p758 = pneg %p169
        %p759 = scmp.lt.s32.totalorder %s40, 3
        %s760 = scalar_select %p759, %s40, 3
        %s761 = scalar_lea.vmem %s5, %s760
        %p762 = pneg %p198
        %p763 = pneg %p195
        %p764 = scmp.lt.s32.totalorder %s40, 3
        %s765 = scalar_select %p764, %s40, 3
        %s766 = scalar_lea.vmem %s6, %s765
        %p767 = pneg %p224
        %p768 = pneg %p221
        %p769 = scmp.lt.s32.totalorder %s40, 3
        %s770 = scalar_select %p769, %s40, 3
        %s771 = scalar_lea.vmem %s7, %s770
        %p772 = pneg %p250
        %p773 = pneg %p247
        %p774 = scmp.lt.s32.totalorder %s40, 3
        %s775 = scalar_select %p774, %s40, 3
        %s776 = smul.addr %s775, 4
        %s777 = smul.addr %s776, 4
        %s778 = scalar_lea.vmem %s8, %s777
        %p779 = pneg %p276
        %p780 = pneg %p273
        %p781 = scmp.lt.s32.totalorder %s40, 3
        %s782 = scalar_select %p781, %s40, 3
        %s783 = scalar_lea.vmem %s9, %s782
        %p784 = pneg %p302
        %p785 = pneg %p299
        %p786 = scmp.lt.s32.totalorder %s40, 3
        %s787 = scalar_select %p786, %s40, 3
        %s788 = smul.addr %s787, 16
        %s789 = smul.addr %s788, 4
        %s790 = scalar_lea.vmem %s10, %s789
        %p791 = pneg %p328
        %p792 = pneg %p325
        %p793 = scmp.lt.s32.totalorder %s40, 3
        %s794 = scalar_select %p793, %s40, 3
        %s795 = scalar_lea.vmem %s11, %s794
        %p796 = pneg %p354
        %p797 = pneg %p351
        %p798 = scmp.lt.s32.totalorder %s40, 3
        %s799 = scalar_select %p798, %s40, 3
        %s800 = scalar_lea.vmem %s12, %s799
        %p801 = pneg %p380
        %p802 = pneg %p377
        %p803 = scmp.lt.s32.totalorder %s40, 3
        %s804 = scalar_select %p803, %s40, 3
        %s805 = scalar_lea.vmem %s13, %s804
        %p806 = pneg %p406
        %p807 = pneg %p403
        %p808 = pneg %p427
        %p809 = pneg %p424
        %p810 = pneg %p448
        %p811 = pneg %p445
        %p812 = pneg %p469
        %p813 = pneg %p466
        %p814 = pneg %p490
        %p815 = pneg %p487
        %p816 = pneg %p511
        %p817 = pneg %p508
        %p818 = pneg %p532
        %p819 = pneg %p529
        %p820 = pneg %p558
        %p821 = pneg %p555
        %s822 = smul.u32 2, %s39
        %p823 = scmp.lt.s32.totalorder %s822, 1
        %s824 = scalar_select %p823, %s822, 1
        %s825 = smul.addr %s824, 8
        %s826 = scalar_lea.vmem %s0, %s825
        %s827 = smul.u32 2, %s39
        %s828 = smul.u32 2, %s39
        %p829 = scmp.lt.s32.totalorder %s828, 1
        %s830 = scalar_select %p829, %s828, 1
        %s831 = smul.addr %s830, 8
        %s832 = scalar_lea.vmem %s1, %s831
        %s833 = smul.u32 2, %s39
        %p834 = scmp.lt.s32.totalorder %s40, 3
        %s835 = scalar_select %p834, %s40, 3
        %s836 = smul.addr %s835, 6
        %s837 = scalar_lea.vmem %s3, %s836
        %p838 = scmp.lt.s32.totalorder %s40, 3
        %s839 = scalar_select %p838, %s40, 3
        %s840 = smul.addr %s839, 8
        %s841 = smul.addr %s840, 4
        %s842 = scalar_lea.vmem %s4, %s841
        %p843 = scmp.lt.s32.totalorder %s40, 3
        %s844 = scalar_select %p843, %s40, 3
        %s845 = scalar_lea.vmem %s5, %s844
        %p846 = scmp.lt.s32.totalorder %s40, 3
        %s847 = scalar_select %p846, %s40, 3
        %s848 = scalar_lea.vmem %s6, %s847
        %p849 = scmp.lt.s32.totalorder %s40, 3
        %s850 = scalar_select %p849, %s40, 3
        %s851 = scalar_lea.vmem %s7, %s850
        %p852 = scmp.lt.s32.totalorder %s40, 3
        %s853 = scalar_select %p852, %s40, 3
        %s854 = smul.addr %s853, 4
        %s855 = smul.addr %s854, 4
        %s856 = scalar_lea.vmem %s8, %s855
        %p857 = scmp.lt.s32.totalorder %s40, 3
        %s858 = scalar_select %p857, %s40, 3
        %s859 = scalar_lea.vmem %s9, %s858
        %p860 = scmp.lt.s32.totalorder %s40, 3
        %s861 = scalar_select %p860, %s40, 3
        %s862 = smul.addr %s861, 16
        %s863 = smul.addr %s862, 4
        %s864 = scalar_lea.vmem %s10, %s863
        %p865 = scmp.lt.s32.totalorder %s40, 3
        %s866 = scalar_select %p865, %s40, 3
        %s867 = scalar_lea.vmem %s11, %s866
        %p868 = scmp.lt.s32.totalorder %s40, 3
        %s869 = scalar_select %p868, %s40, 3
        %s870 = scalar_lea.vmem %s12, %s869
        %p871 = scmp.lt.s32.totalorder %s40, 3
        %s872 = scalar_select %p871, %s40, 3
        %s873 = scalar_lea.vmem %s13, %s872
        %s874 = smul.u32 2, %s39
        %p876 = scmp.eq.s32.totalorder %s40, 0
        // Predicated region
        $region105: #{transformer_forward.1} parent=99 // pred_check
          %p877 = pneg %p876
        $region106: #{transformer_forward.1} parent=99 // pred_check_branch
          %879 = sbr.rel (%p877) target = $region108
        $region107: #{transformer_forward.1} parent=99 // pred_region
          %v880 = vld [vmem:[%s826] sm:$0xff]
          %v881 = vld [vmem:[%s826 + $0x8] sm:$0xff]
          %vm882 = vcmask 261120
          %883 = vst.msk [vmem:[#allocation2] sm:$0xff] %vm882, %v880
          %884 = vst.msk [vmem:[#allocation2 + $0x8] sm:$0xff] %vm882, %v881
        $region108: #{transformer_forward.1} parent=99 // pred_fallthru
          _
        %v885 = vld [vmem:[#allocation2] sm:$0xff]
        %v886 = vld [vmem:[#allocation2 + $0x8] sm:$0xff]
        %v887 = vpack.c.bf16 %v886, %v885
        %v888 = vld [vmem:[%s832] sm:$0xff]
        %v889 = vld [vmem:[%s832 + $0x8] sm:$0xff]
        %v890 = vld [vmem:[%s719] sm:$0xf]
        %v891 = vld [vmem:[%s719 + $0x4] sm:$0xf]
        %v892 = vld [vmem:[%s719 + $0x8] sm:$0xf]
        %v893 = vld [vmem:[%s719 + $0xc] sm:$0xf]
        %v894 = vld [vmem:[%s837] sm:$0x1]
        %v896 = vperm.slane %v894, 0
        %v902 = vunpack.c.l.b16 %v890
        %v903 = vunpack.c.l.b16 %v891
        %v904 = vunpack.c.l.b16 %v892
        %v905 = vunpack.c.l.b16 %v893
        %v906 = vpack.c.b16 %v903, %v902
        %v907 = vpack.c.b16 %v905, %v904
        %vm910 = vcmask 261120
        %v912 = vsel %vm910, %v887, 0
        %914 = vmatpush.bf16.msra.mxu0 0
        %915 = vmatpush.bf16.msra.mxu0 0
        %916 = vmatpush.bf16.msra.mxu0 0
        %917 = vmatpush.bf16.msra.mxu0 0
        %918 = vmatpush.bf16.msra.mxu0 0
        %919 = vmatpush.bf16.msra.mxu0 0
        %920 = vmatpush.bf16.msra.mxu0 %v907
        %921 = vmatpush.bf16.msra.mxu0 %v906
        %922 = vmatmul.bf16.gmra.mxu0 %v912
        %v923 = vpop.f32.mrf.mxu0
        %v924 = vadd.f32 %v896, %v923
        %v925 = vpop.f32.mrf.mxu0
        %v926 = vadd.f32 %v896, %v925
        %927 = vdwg.mxu0
        %s928 = scalar_lea.vmem %s719, 32 [#allocation3]
        %v929 = vld [vmem:[%s928] sm:$0xf]
        %v930 = vld [vmem:[%s928 + $0x4] sm:$0xf]
        %v931 = vld [vmem:[%s928 + $0x8] sm:$0xf]
        %v932 = vld [vmem:[%s928 + $0xc] sm:$0xf]
        %s933 = scalar_lea.vmem %s837, 2
        %v934 = vld [vmem:[%s933] sm:$0x1]
        %v936 = vperm.slane %v934, 0
        %v942 = vunpack.c.l.b16 %v929
        %v943 = vunpack.c.l.b16 %v930
        %v944 = vunpack.c.l.b16 %v931
        %v945 = vunpack.c.l.b16 %v932
        %v946 = vpack.c.b16 %v943, %v942
        %v947 = vpack.c.b16 %v945, %v944
        %950 = vmatpush.bf16.msra.mxu0 0
        %951 = vmatpush.bf16.msra.mxu0 0
        %952 = vmatpush.bf16.msra.mxu0 0
        %953 = vmatpush.bf16.msra.mxu0 0
        %954 = vmatpush.bf16.msra.mxu0 0
        %955 = vmatpush.bf16.msra.mxu0 0
        %956 = vmatpush.bf16.msra.mxu0 %v947
        %957 = vmatpush.bf16.msra.mxu0 %v946
        %958 = vmatmul.bf16.gmra.mxu0 %v912
        %v959 = vpop.f32.mrf.mxu0
        %v960 = vadd.f32 %v936, %v959
        %v961 = vpop.f32.mrf.mxu0
        %v962 = vadd.f32 %v936, %v961
        %963 = vdwg.mxu0
        %s964 = scalar_lea.vmem %s719, 64 [#allocation3]
        %v965 = vld [vmem:[%s964] sm:$0xf]
        %v966 = vld [vmem:[%s964 + $0x4] sm:$0xf]
        %v967 = vld [vmem:[%s964 + $0x8] sm:$0xf]
        %v968 = vld [vmem:[%s964 + $0xc] sm:$0xf]
        %s969 = scalar_lea.vmem %s837, 4
        %v970 = vld [vmem:[%s969] sm:$0x1]
        %v972 = vperm.slane %v970, 0
        %v978 = vunpack.c.l.b16 %v965
        %v979 = vunpack.c.l.b16 %v966
        %v980 = vunpack.c.l.b16 %v967
        %v981 = vunpack.c.l.b16 %v968
        %v982 = vpack.c.b16 %v979, %v978
        %v983 = vpack.c.b16 %v981, %v980
        %986 = vmatpush.bf16.msra.mxu0 0
        %987 = vmatpush.bf16.msra.mxu0 0
        %988 = vmatpush.bf16.msra.mxu0 0
        %989 = vmatpush.bf16.msra.mxu0 0
        %990 = vmatpush.bf16.msra.mxu0 0
        %991 = vmatpush.bf16.msra.mxu0 0
        %992 = vmatpush.bf16.msra.mxu0 %v983
        %993 = vmatpush.bf16.msra.mxu0 %v982
        %994 = vmatmul.bf16.gmra.mxu0 %v912
        %v995 = vpop.f32.mrf.mxu0
        %v996 = vadd.f32 %v972, %v995
        %v997 = vpop.f32.mrf.mxu0
        %v998 = vadd.f32 %v972, %v997
        %999 = vdwg.mxu0
        %v1000 = vpack.c.bf16 %v924, %v924
        %v1001 = vpack.c.bf16 %v926, %v926
        %v1002 = vpack.c.bf16 %v960, %v960
        %v1003 = vpack.c.bf16 %v962, %v962
        %v1004 = vpack.c.bf16 %v996, %v996
        %v1005 = vpack.c.bf16 %v998, %v998
        %v1007 = vsel %vm910, %v1000, 0
        %v1010 = vsel %vm910, %v1002, 0
        %1012 = vmatpush.bf16.xpose.msra.mxu0 0
        %1013 = vmatpush.bf16.xpose.msra.mxu0 0
        %1014 = vmatpush.bf16.xpose.msra.mxu0 0
        %1015 = vmatpush.bf16.xpose.msra.mxu0 0
        %1016 = vmatpush.bf16.xpose.msra.mxu0 0
        %1017 = vmatpush.bf16.xpose.msra.mxu0 0
        %1018 = vmatpush.bf16.xpose.msra.mxu0 0
        %1019 = vmatpush.bf16.xpose.msra.mxu0 %v1010
        %1020 = vmatmul.bf16.gmra.mxu0 %v1007
        %v1021 = vpop.f32.mrf.mxu0
        %v1022 = vadd.f32 0.0, %v1021
        %v1023 = vpop.f32.mrf.mxu0
        %1024 = vdwg.mxu0
        %v1026 = vsel %vm910, %v1001, 0
        %v1029 = vsel %vm910, %v1003, 0
        %1031 = vmatpush.bf16.xpose.msra.mxu0 0
        %1032 = vmatpush.bf16.xpose.msra.mxu0 0
        %1033 = vmatpush.bf16.xpose.msra.mxu0 0
        %1034 = vmatpush.bf16.xpose.msra.mxu0 0
        %1035 = vmatpush.bf16.xpose.msra.mxu0 0
        %1036 = vmatpush.bf16.xpose.msra.mxu0 0
        %1037 = vmatpush.bf16.xpose.msra.mxu0 0
        %1038 = vmatpush.bf16.xpose.msra.mxu0 %v1029
        %1039 = vmatmul.bf16.gmra.mxu0 %v1026
        %v1040 = vpop.f32.mrf.mxu0
        %v1041 = vadd.f32 0.0, %v1040
        %v1042 = vpop.f32.mrf.mxu0
        %1043 = vdwg.mxu0
        %vm1044 = vcmp.eq.s32.totalorder %v888, 0
        %vm1045 = vcmp.eq.s32.totalorder %v889, 0
        %v1046 = vsel %vm1044, -1e+09, %v1022
        %v1047 = vsel %vm1045, -1e+09, %v1041
        %vm1048 = vcmask 64512
        %v1049 = vsel %vm1048, %v1046, -inf
        %1050 = vmax.xlane.f32.xlu0 %v1049
        %v1051 = vpop.xlane.xlu0 %1050
        %v1052 = vsel %vm1048, %v1047, -inf
        %1053 = vmax.xlane.f32.xlu0 %v1052
        %v1054 = vpop.xlane.xlu0 %1053
        %v1055 = vsub.f32 %v1046, %v1051
        %v1056 = vsub.f32 %v1047, %v1054
        %v1057 = vmul.f32 %v1055, 1.442695
        %v1058 = vpow.pop %v1057
        %v1059 = vmul.f32 %v1056, 1.442695
        %v1060 = vpow.pop %v1059
        %v1061 = vsel %vm1048, %v1058, 0.0
        %1062 = vadd.xlane.f32.xlu0 %v1061
        %v1063 = vpop.xlane.xlu0 %1062
        %v1064 = vsel %vm1048, %v1060, 0.0
        %1065 = vadd.xlane.f32.xlu0 %v1064
        %v1066 = vpop.xlane.xlu0 %1065
        %v1067 = vrcp.pop %v1063
        %v1068 = vmul.f32 %v1063, %v1067
        %v1069 = vsub.f32 1.0, %v1068
        %v1070 = vmul.f32 %v1067, %v1069
        %v1071 = vadd.f32 %v1067, %v1070
        %vm1072 = vweird.f32 %v1063
        %vm1073 = vweird.f32 %v1067
        %vm1074 = vmor %vm1072, %vm1073
        %v1075 = vsel %vm1074, %v1067, %v1071
        %v1076 = vand.u32 2147483647, %v1063
        %vm1077 = vcmp.eq.f32.partialorder %v1076, 8.507059e+37
        %v1078 = vand.u32 %v1063, 2147483648
        %v1079 = vor.u32 1.1754944e-38, %v1078
        %v1080 = vsel %vm1077, %v1079, %v1075
        %v1081 = vmul.f32 %v1058, %v1080
        %v1082 = vrcp.pop %v1066
        %v1083 = vmul.f32 %v1066, %v1082
        %v1084 = vsub.f32 1.0, %v1083
        %v1085 = vmul.f32 %v1082, %v1084
        %v1086 = vadd.f32 %v1082, %v1085
        %vm1087 = vweird.f32 %v1066
        %vm1088 = vweird.f32 %v1082
        %vm1089 = vmor %vm1087, %vm1088
        %v1090 = vsel %vm1089, %v1082, %v1086
        %v1091 = vand.u32 2147483647, %v1066
        %vm1092 = vcmp.eq.f32.partialorder %v1091, 8.507059e+37
        %v1093 = vand.u32 %v1066, 2147483648
        %v1094 = vor.u32 1.1754944e-38, %v1093
        %v1095 = vsel %vm1092, %v1094, %v1090
        %v1096 = vmul.f32 %v1060, %v1095
        %v1097 = vpack.c.bf16 %v1081, %v1081
        %v1098 = vpack.c.bf16 %v1096, %v1096
        %v1100 = vsel %vm1048, %v1097, 0
        %vm1102 = vcmask 1043456
        %v1104 = vsel %vm1102, %v1004, 0
        %1106 = vmatpush.bf16.msra.mxu0 0
        %1107 = vmatpush.bf16.msra.mxu0 0
        %1108 = vmatpush.bf16.msra.mxu0 0
        %1109 = vmatpush.bf16.msra.mxu0 0
        %1110 = vmatpush.bf16.msra.mxu0 0
        %1111 = vmatpush.bf16.msra.mxu0 0
        %1112 = vmatpush.bf16.msra.mxu0 0
        %1113 = vmatpush.bf16.msra.mxu0 %v1104
        %1114 = vmatmul.bf16.gmra.mxu0 %v1100
        %v1115 = vpop.f32.mrf.mxu0
        %v1116 = vadd.f32 0.0, %v1115
        %v1117 = vpop.f32.mrf.mxu0
        %1118 = vdwg.mxu0
        %v1120 = vsel %vm1048, %v1098, 0
        %v1123 = vsel %vm1102, %v1005, 0
        %1125 = vmatpush.bf16.msra.mxu0 0
        %1126 = vmatpush.bf16.msra.mxu0 0
        %1127 = vmatpush.bf16.msra.mxu0 0
        %1128 = vmatpush.bf16.msra.mxu0 0
        %1129 = vmatpush.bf16.msra.mxu0 0
        %1130 = vmatpush.bf16.msra.mxu0 0
        %1131 = vmatpush.bf16.msra.mxu0 0
        %1132 = vmatpush.bf16.msra.mxu0 %v1123
        %1133 = vmatmul.bf16.gmra.mxu0 %v1120
        %v1134 = vpop.f32.mrf.mxu0
        %v1135 = vadd.f32 0.0, %v1134
        %v1136 = vpop.f32.mrf.mxu0
        %1137 = vdwg.mxu0
        %v1138 = vpack.c.bf16 %v1135, %v1116
        %v1139 = vld [vmem:[%s842] sm:$0xf]
        %v1140 = vld [vmem:[%s842 + $0x4] sm:$0xf]
        %v1141 = vld [vmem:[%s842 + $0x8] sm:$0xf]
        %v1142 = vld [vmem:[%s842 + $0xc] sm:$0xf]
        %s1143 = scalar_lea.vmem %s719, 16 [#allocation3]
        %v1144 = vld [vmem:[%s1143] sm:$0xf]
        %v1145 = vld [vmem:[%s1143 + $0x4] sm:$0xf]
        %v1146 = vld [vmem:[%s1143 + $0x8] sm:$0xf]
        %v1147 = vld [vmem:[%s1143 + $0xc] sm:$0xf]
        %s1148 = scalar_lea.vmem %s837, 1
        %v1149 = vld [vmem:[%s1148] sm:$0x1]
        %v1151 = vperm.slane %v1149, 0
        %v1157 = vunpack.c.l.b16 %v1144
        %v1158 = vunpack.c.l.b16 %v1145
        %v1159 = vunpack.c.l.b16 %v1146
        %v1160 = vunpack.c.l.b16 %v1147
        %v1161 = vpack.c.b16 %v1158, %v1157
        %v1162 = vpack.c.b16 %v1160, %v1159
        %1165 = vmatpush.bf16.msra.mxu0 0
        %1166 = vmatpush.bf16.msra.mxu0 0
        %1167 = vmatpush.bf16.msra.mxu0 0
        %1168 = vmatpush.bf16.msra.mxu0 0
        %1169 = vmatpush.bf16.msra.mxu0 0
        %1170 = vmatpush.bf16.msra.mxu0 0
        %1171 = vmatpush.bf16.msra.mxu0 %v1162
        %1172 = vmatpush.bf16.msra.mxu0 %v1161
        %1173 = vmatmul.bf16.gmra.mxu0 %v912
        %v1174 = vpop.f32.mrf.mxu0
        %v1175 = vadd.f32 %v1151, %v1174
        %v1176 = vpop.f32.mrf.mxu0
        %v1177 = vadd.f32 %v1151, %v1176
        %1178 = vdwg.mxu0
        %s1179 = scalar_lea.vmem %s719, 48 [#allocation3]
        %v1180 = vld [vmem:[%s1179] sm:$0xf]
        %v1181 = vld [vmem:[%s1179 + $0x4] sm:$0xf]
        %v1182 = vld [vmem:[%s1179 + $0x8] sm:$0xf]
        %v1183 = vld [vmem:[%s1179 + $0xc] sm:$0xf]
        %s1184 = scalar_lea.vmem %s837, 3
        %v1185 = vld [vmem:[%s1184] sm:$0x1]
        %v1187 = vperm.slane %v1185, 0
        %v1193 = vunpack.c.l.b16 %v1180
        %v1194 = vunpack.c.l.b16 %v1181
        %v1195 = vunpack.c.l.b16 %v1182
        %v1196 = vunpack.c.l.b16 %v1183
        %v1197 = vpack.c.b16 %v1194, %v1193
        %v1198 = vpack.c.b16 %v1196, %v1195
        %1201 = vmatpush.bf16.msra.mxu0 0
        %1202 = vmatpush.bf16.msra.mxu0 0
        %1203 = vmatpush.bf16.msra.mxu0 0
        %1204 = vmatpush.bf16.msra.mxu0 0
        %1205 = vmatpush.bf16.msra.mxu0 0
        %1206 = vmatpush.bf16.msra.mxu0 0
        %1207 = vmatpush.bf16.msra.mxu0 %v1198
        %1208 = vmatpush.bf16.msra.mxu0 %v1197
        %1209 = vmatmul.bf16.gmra.mxu0 %v912
        %v1210 = vpop.f32.mrf.mxu0
        %v1211 = vadd.f32 %v1187, %v1210
        %v1212 = vpop.f32.mrf.mxu0
        %v1213 = vadd.f32 %v1187, %v1212
        %1214 = vdwg.mxu0
        %s1215 = scalar_lea.vmem %s719, 80 [#allocation3]
        %v1216 = vld [vmem:[%s1215] sm:$0xf]
        %v1217 = vld [vmem:[%s1215 + $0x4] sm:$0xf]
        %v1218 = vld [vmem:[%s1215 + $0x8] sm:$0xf]
        %v1219 = vld [vmem:[%s1215 + $0xc] sm:$0xf]
        %s1220 = scalar_lea.vmem %s837, 5
        %v1221 = vld [vmem:[%s1220] sm:$0x1]
        %v1223 = vperm.slane %v1221, 0
        %v1229 = vunpack.c.l.b16 %v1216
        %v1230 = vunpack.c.l.b16 %v1217
        %v1231 = vunpack.c.l.b16 %v1218
        %v1232 = vunpack.c.l.b16 %v1219
        %v1233 = vpack.c.b16 %v1230, %v1229
        %v1234 = vpack.c.b16 %v1232, %v1231
        %1237 = vmatpush.bf16.msra.mxu0 0
        %1238 = vmatpush.bf16.msra.mxu0 0
        %1239 = vmatpush.bf16.msra.mxu0 0
        %1240 = vmatpush.bf16.msra.mxu0 0
        %1241 = vmatpush.bf16.msra.mxu0 0
        %1242 = vmatpush.bf16.msra.mxu0 0
        %1243 = vmatpush.bf16.msra.mxu0 %v1234
        %1244 = vmatpush.bf16.msra.mxu0 %v1233
        %1245 = vmatmul.bf16.gmra.mxu0 %v912
        %v1246 = vpop.f32.mrf.mxu0
        %v1247 = vadd.f32 %v1223, %v1246
        %v1248 = vpop.f32.mrf.mxu0
        %v1249 = vadd.f32 %v1223, %v1248
        %1250 = vdwg.mxu0
        %v1251 = vpack.c.bf16 %v1175, %v1175
        %v1252 = vpack.c.bf16 %v1177, %v1177
        %v1253 = vpack.c.bf16 %v1211, %v1211
        %v1254 = vpack.c.bf16 %v1213, %v1213
        %v1255 = vpack.c.bf16 %v1247, %v1247
        %v1256 = vpack.c.bf16 %v1249, %v1249
        %v1258 = vsel %vm910, %v1251, 0
        %v1261 = vsel %vm910, %v1253, 0
        %1263 = vmatpush.bf16.xpose.msra.mxu0 0
        %1264 = vmatpush.bf16.xpose.msra.mxu0 0
        %1265 = vmatpush.bf16.xpose.msra.mxu0 0
        %1266 = vmatpush.bf16.xpose.msra.mxu0 0
        %1267 = vmatpush.bf16.xpose.msra.mxu0 0
        %1268 = vmatpush.bf16.xpose.msra.mxu0 0
        %1269 = vmatpush.bf16.xpose.msra.mxu0 0
        %1270 = vmatpush.bf16.xpose.msra.mxu0 %v1261
        %1271 = vmatmul.bf16.gmra.mxu0 %v1258
        %v1272 = vpop.f32.mrf.mxu0
        %v1273 = vadd.f32 0.0, %v1272
        %v1274 = vpop.f32.mrf.mxu0
        %1275 = vdwg.mxu0
        %v1277 = vsel %vm910, %v1252, 0
        %v1280 = vsel %vm910, %v1254, 0
        %1282 = vmatpush.bf16.xpose.msra.mxu0 0
        %1283 = vmatpush.bf16.xpose.msra.mxu0 0
        %1284 = vmatpush.bf16.xpose.msra.mxu0 0
        %1285 = vmatpush.bf16.xpose.msra.mxu0 0
        %1286 = vmatpush.bf16.xpose.msra.mxu0 0
        %1287 = vmatpush.bf16.xpose.msra.mxu0 0
        %1288 = vmatpush.bf16.xpose.msra.mxu0 0
        %1289 = vmatpush.bf16.xpose.msra.mxu0 %v1280
        %1290 = vmatmul.bf16.gmra.mxu0 %v1277
        %v1291 = vpop.f32.mrf.mxu0
        %v1292 = vadd.f32 0.0, %v1291
        %v1293 = vpop.f32.mrf.mxu0
        %1294 = vdwg.mxu0
        %v1295 = vsel %vm1044, -1e+09, %v1273
        %v1296 = vsel %vm1045, -1e+09, %v1292
        %v1297 = vsel %vm1048, %v1295, -inf
        %1298 = vmax.xlane.f32.xlu0 %v1297
        %v1299 = vpop.xlane.xlu0 %1298
        %v1300 = vsel %vm1048, %v1296, -inf
        %1301 = vmax.xlane.f32.xlu0 %v1300
        %v1302 = vpop.xlane.xlu0 %1301
        %v1303 = vsub.f32 %v1295, %v1299
        %v1304 = vsub.f32 %v1296, %v1302
        %v1305 = vmul.f32 %v1303, 1.442695
        %v1306 = vpow.pop %v1305
        %v1307 = vmul.f32 %v1304, 1.442695
        %v1308 = vpow.pop %v1307
        %v1309 = vsel %vm1048, %v1306, 0.0
        %1310 = vadd.xlane.f32.xlu0 %v1309
        %v1311 = vpop.xlane.xlu0 %1310
        %v1312 = vsel %vm1048, %v1308, 0.0
        %1313 = vadd.xlane.f32.xlu0 %v1312
        %v1314 = vpop.xlane.xlu0 %1313
        %v1315 = vrcp.pop %v1311
        %v1316 = vmul.f32 %v1311, %v1315
        %v1317 = vsub.f32 1.0, %v1316
        %v1318 = vmul.f32 %v1315, %v1317
        %v1319 = vadd.f32 %v1315, %v1318
        %vm1320 = vweird.f32 %v1311
        %vm1321 = vweird.f32 %v1315
        %vm1322 = vmor %vm1320, %vm1321
        %v1323 = vsel %vm1322, %v1315, %v1319
        %v1324 = vand.u32 2147483647, %v1311
        %vm1325 = vcmp.eq.f32.partialorder %v1324, 8.507059e+37
        %v1326 = vand.u32 %v1311, 2147483648
        %v1327 = vor.u32 1.1754944e-38, %v1326
        %v1328 = vsel %vm1325, %v1327, %v1323
        %v1329 = vmul.f32 %v1306, %v1328
        %v1330 = vrcp.pop %v1314
        %v1331 = vmul.f32 %v1314, %v1330
        %v1332 = vsub.f32 1.0, %v1331
        %v1333 = vmul.f32 %v1330, %v1332
        %v1334 = vadd.f32 %v1330, %v1333
        %vm1335 = vweird.f32 %v1314
        %vm1336 = vweird.f32 %v1330
        %vm1337 = vmor %vm1335, %vm1336
        %v1338 = vsel %vm1337, %v1330, %v1334
        %v1339 = vand.u32 2147483647, %v1314
        %vm1340 = vcmp.eq.f32.partialorder %v1339, 8.507059e+37
        %v1341 = vand.u32 %v1314, 2147483648
        %v1342 = vor.u32 1.1754944e-38, %v1341
        %v1343 = vsel %vm1340, %v1342, %v1338
        %v1344 = vmul.f32 %v1308, %v1343
        %v1345 = vpack.c.bf16 %v1329, %v1329
        %v1346 = vpack.c.bf16 %v1344, %v1344
        %v1348 = vsel %vm1048, %v1345, 0
        %v1351 = vsel %vm1102, %v1255, 0
        %1353 = vmatpush.bf16.msra.mxu0 0
        %1354 = vmatpush.bf16.msra.mxu0 0
        %1355 = vmatpush.bf16.msra.mxu0 0
        %1356 = vmatpush.bf16.msra.mxu0 0
        %1357 = vmatpush.bf16.msra.mxu0 0
        %1358 = vmatpush.bf16.msra.mxu0 0
        %1359 = vmatpush.bf16.msra.mxu0 0
        %1360 = vmatpush.bf16.msra.mxu0 %v1351
        %1361 = vmatmul.bf16.gmra.mxu0 %v1348
        %v1362 = vpop.f32.mrf.mxu0
        %v1363 = vadd.f32 0.0, %v1362
        %v1364 = vpop.f32.mrf.mxu0
        %1365 = vdwg.mxu0
        %v1367 = vsel %vm1048, %v1346, 0
        %v1370 = vsel %vm1102, %v1256, 0
        %1372 = vmatpush.bf16.msra.mxu0 0
        %1373 = vmatpush.bf16.msra.mxu0 0
        %1374 = vmatpush.bf16.msra.mxu0 0
        %1375 = vmatpush.bf16.msra.mxu0 0
        %1376 = vmatpush.bf16.msra.mxu0 0
        %1377 = vmatpush.bf16.msra.mxu0 0
        %1378 = vmatpush.bf16.msra.mxu0 0
        %1379 = vmatpush.bf16.msra.mxu0 %v1370
        %1380 = vmatmul.bf16.gmra.mxu0 %v1367
        %v1381 = vpop.f32.mrf.mxu0
        %v1382 = vadd.f32 0.0, %v1381
        %v1383 = vpop.f32.mrf.mxu0
        %1384 = vdwg.mxu0
        %v1385 = vpack.c.bf16 %v1382, %v1363
        %s1386 = scalar_lea.vmem %s842, 16
        %v1387 = vld [vmem:[%s1386] sm:$0xf]
        %v1388 = vld [vmem:[%s1386 + $0x4] sm:$0xf]
        %v1389 = vld [vmem:[%s1386 + $0x8] sm:$0xf]
        %v1390 = vld [vmem:[%s1386 + $0xc] sm:$0xf]
        %v1395 = vunpack.c.l.b16 %v1387
        %v1396 = vunpack.c.l.b16 %v1388
        %v1397 = vunpack.c.l.b16 %v1389
        %v1398 = vunpack.c.l.b16 %v1390
        %v1399 = vpack.c.b16 %v1396, %v1395
        %v1400 = vpack.c.b16 %v1398, %v1397
        %v1404 = vsel %vm910, %v1385, 0
        %1406 = vmatpush.bf16.msra.mxu0 0
        %1407 = vmatpush.bf16.msra.mxu0 0
        %1408 = vmatpush.bf16.msra.mxu0 0
        %1409 = vmatpush.bf16.msra.mxu0 0
        %1410 = vmatpush.bf16.msra.mxu0 0
        %1411 = vmatpush.bf16.msra.mxu0 0
        %1412 = vmatpush.bf16.msra.mxu0 %v1400
        %1413 = vmatpush.bf16.msra.mxu0 %v1399
        %1414 = vmatmul.bf16.gmra.mxu0 %v1404
        %v1415 = vpop.f32.mrf.mxu0
        %v1416 = vadd.f32 0.0, %v1415
        %v1417 = vpop.f32.mrf.mxu0
        %v1418 = vadd.f32 0.0, %v1417
        %1419 = vdwg.mxu0
        %v1424 = vunpack.c.l.b16 %v1139
        %v1425 = vunpack.c.l.b16 %v1140
        %v1426 = vunpack.c.l.b16 %v1141
        %v1427 = vunpack.c.l.b16 %v1142
        %v1428 = vpack.c.b16 %v1425, %v1424
        %v1429 = vpack.c.b16 %v1427, %v1426
        %v1433 = vsel %vm910, %v1138, 0
        %1435 = vmatpush.bf16.msra.mxu0 0
        %1436 = vmatpush.bf16.msra.mxu0 0
        %1437 = vmatpush.bf16.msra.mxu0 0
        %1438 = vmatpush.bf16.msra.mxu0 0
        %1439 = vmatpush.bf16.msra.mxu0 0
        %1440 = vmatpush.bf16.msra.mxu0 0
        %1441 = vmatpush.bf16.msra.mxu0 %v1429
        %1442 = vmatpush.bf16.msra.mxu0 %v1428
        %1443 = vmatmul.bf16.gmra.mxu0 %v1433
        %v1444 = vpop.f32.mrf.mxu0
        %v1445 = vadd.f32 %v1416, %v1444
        %v1446 = vpop.f32.mrf.mxu0
        %v1447 = vadd.f32 %v1418, %v1446
        %1448 = vdwg.mxu0
        %v1449 = vld [vmem:[%s845] sm:$0x1]
        %v1451 = vperm.slane %v1449, 0
        %v1453 = vadd.f32 %v1445, %v1451
        %v1454 = vadd.f32 %v1447, %v1451
        %v1455 = vadd.f32 %v885, %v1453
        %v1456 = vadd.f32 %v886, %v1454
        %v1457 = vld [vmem:[%s848] sm:$0x1]
        %v1458 = vld [vmem:[%s851] sm:$0x1]
        %v1459 = vsel %vm910, %v1455, 0.0
        %1460 = vadd.xlane.f32.xlu0 %v1459
        %v1461 = vpop.xlane.xlu0 %1460
        %v1462 = vsel %vm910, %v1456, 0.0
        %1463 = vadd.xlane.f32.xlu0 %v1462
        %v1464 = vpop.xlane.xlu0 %1463
        %v1465 = vrcp.pop 32.0
        %v1466 = vmul.f32 32.0, %v1465
        %v1467 = vsub.f32 1.0, %v1466
        %v1468 = vmul.f32 %v1465, %v1467
        %v1469 = vadd.f32 %v1465, %v1468
        %vm1470 = vweird.f32 %v1465
        %v1471 = vsel %vm1470, %v1465, %v1469
        %v1472 = vmul.f32 %v1461, %v1471
        %v1473 = vmul.f32 %v1464, %v1471
        %v1474 = vsub.f32 %v1455, %v1472
        %v1475 = vsub.f32 %v1456, %v1473
        %v1476 = vmul.f32 %v1474, %v1474
        %v1477 = vmul.f32 %v1475, %v1475
        %v1478 = vsel %vm910, %v1476, 0.0
        %1479 = vadd.xlane.f32.xlu0 %v1478
        %v1480 = vpop.xlane.xlu0 %1479
        %v1481 = vsel %vm910, %v1477, 0.0
        %1482 = vadd.xlane.f32.xlu0 %v1481
        %v1483 = vpop.xlane.xlu0 %1482
        %v1484 = vmul.f32 %v1480, %v1471
        %v1485 = vmul.f32 %v1483, %v1471
        %v1486 = vadd.f32 %v1484, 1e-05
        %v1487 = vadd.f32 %v1485, 1e-05
        %v1488 = vrsqrt.pop %v1486
        %v1489 = vmul.f32 %v1488, %v1486
        %v1490 = vmul.f32 %v1489, %v1488
        %v1491 = vmul.f32 0.5, %v1490
        %v1492 = vsub.f32 1.5, %v1491
        %v1493 = vmul.f32 %v1488, %v1492
        %vm1494 = vweird.f32 %v1486
        %vm1495 = vweird.f32 %v1488
        %vm1496 = vmor %vm1494, %vm1495
        %v1497 = vsel %vm1496, %v1488, %v1493
        %v1498 = vrsqrt.pop %v1487
        %v1499 = vmul.f32 %v1498, %v1487
        %v1500 = vmul.f32 %v1499, %v1498
        %v1501 = vmul.f32 0.5, %v1500
        %v1502 = vsub.f32 1.5, %v1501
        %v1503 = vmul.f32 %v1498, %v1502
        %vm1504 = vweird.f32 %v1487
        %vm1505 = vweird.f32 %v1498
        %vm1506 = vmor %vm1504, %vm1505
        %v1507 = vsel %vm1506, %v1498, %v1503
        %v1508 = vmul.f32 %v1474, %v1497
        %v1509 = vmul.f32 %v1475, %v1507
        %v1511 = vperm.slane %v1457, 0
        %v1513 = vmul.f32 %v1508, %v1511
        %v1514 = vmul.f32 %v1509, %v1511
        %v1516 = vperm.slane %v1458, 0
        %v1518 = vadd.f32 %v1513, %v1516
        %v1519 = vadd.f32 %v1514, %v1516
        %v1520 = vpack.c.bf16 %v1519, %v1518
        %v1521 = vld [vmem:[%s856] sm:$0xf]
        %v1522 = vld [vmem:[%s856 + $0x4] sm:$0xf]
        %v1523 = vld [vmem:[%s856 + $0x8] sm:$0xf]
        %v1524 = vld [vmem:[%s856 + $0xc] sm:$0xf]
        %v1525 = vld [vmem:[%s859] sm:$0x1]
        %v1527 = vperm.slane %v1525, 0
        %v1533 = vunpack.c.l.b16 %v1521
        %v1534 = vunpack.c.l.b16 %v1522
        %v1535 = vunpack.c.l.b16 %v1523
        %v1536 = vunpack.c.l.b16 %v1524
        %v1537 = vpack.c.b16 %v1534, %v1533
        %v1538 = vpack.c.b16 %v1536, %v1535
        %v1542 = vsel %vm910, %v1520, 0
        %1544 = vmatpush.bf16.msra.mxu0 0
        %1545 = vmatpush.bf16.msra.mxu0 0
        %1546 = vmatpush.bf16.msra.mxu0 0
        %1547 = vmatpush.bf16.msra.mxu0 0
        %1548 = vmatpush.bf16.msra.mxu0 0
        %1549 = vmatpush.bf16.msra.mxu0 0
        %1550 = vmatpush.bf16.msra.mxu0 %v1538
        %1551 = vmatpush.bf16.msra.mxu0 %v1537
        %1552 = vmatmul.bf16.gmra.mxu0 %v1542
        %v1553 = vpop.f32.mrf.mxu0
        %v1554 = vadd.f32 %v1527, %v1553
        %v1555 = vpop.f32.mrf.mxu0
        %v1556 = vadd.f32 %v1527, %v1555
        %1557 = vdwg.mxu0
        %v1558 = vmax.f32 %v1554, 0.0
        %v1559 = vmax.f32 %v1556, 0.0
        %v1560 = vpack.c.bf16 %v1559, %v1558
        %v1561 = vld [vmem:[%s864] sm:$0xf]
        %v1562 = vld [vmem:[%s864 + $0x4] sm:$0xf]
        %v1563 = vld [vmem:[%s864 + $0x8] sm:$0xf]
        %v1564 = vld [vmem:[%s864 + $0xc] sm:$0xf]
        %v1565 = vld [vmem:[%s864 + $0x10] sm:$0xf]
        %v1566 = vld [vmem:[%s864 + $0x14] sm:$0xf]
        %v1567 = vld [vmem:[%s864 + $0x18] sm:$0xf]
        %v1568 = vld [vmem:[%s864 + $0x1c] sm:$0xf]
        %v1569 = vld [vmem:[%s864 + $0x20] sm:$0xf]
        %v1570 = vld [vmem:[%s864 + $0x24] sm:$0xf]
        %v1571 = vld [vmem:[%s864 + $0x28] sm:$0xf]
        %v1572 = vld [vmem:[%s864 + $0x2c] sm:$0xf]
        %v1573 = vld [vmem:[%s864 + $0x30] sm:$0xf]
        %v1574 = vld [vmem:[%s864 + $0x34] sm:$0xf]
        %v1575 = vld [vmem:[%s864 + $0x38] sm:$0xf]
        %v1576 = vld [vmem:[%s864 + $0x3c] sm:$0xf]
        %v1577 = vld [vmem:[%s867] sm:$0x1]
        %v1579 = vperm.slane %v1577, 0
        %v1597 = vunpack.c.l.b16 %v1561
        %v1598 = vunpack.c.l.b16 %v1562
        %v1599 = vunpack.c.l.b16 %v1563
        %v1600 = vunpack.c.l.b16 %v1564
        %v1601 = vunpack.c.l.b16 %v1565
        %v1602 = vunpack.c.l.b16 %v1566
        %v1603 = vunpack.c.l.b16 %v1567
        %v1604 = vunpack.c.l.b16 %v1568
        %v1605 = vunpack.c.l.b16 %v1569
        %v1606 = vunpack.c.l.b16 %v1570
        %v1607 = vunpack.c.l.b16 %v1571
        %v1608 = vunpack.c.l.b16 %v1572
        %v1609 = vunpack.c.l.b16 %v1573
        %v1610 = vunpack.c.l.b16 %v1574
        %v1611 = vunpack.c.l.b16 %v1575
        %v1612 = vunpack.c.l.b16 %v1576
        %v1613 = vpack.c.b16 %v1598, %v1597
        %v1614 = vpack.c.b16 %v1600, %v1599
        %v1615 = vpack.c.b16 %v1602, %v1601
        %v1616 = vpack.c.b16 %v1604, %v1603
        %v1617 = vpack.c.b16 %v1606, %v1605
        %v1618 = vpack.c.b16 %v1608, %v1607
        %v1619 = vpack.c.b16 %v1610, %v1609
        %v1620 = vpack.c.b16 %v1612, %v1611
        %1629 = vmatpush.bf16.msra.mxu0 %v1620
        %1630 = vmatpush.bf16.msra.mxu0 %v1619
        %1631 = vmatpush.bf16.msra.mxu0 %v1618
        %1632 = vmatpush.bf16.msra.mxu0 %v1617
        %1633 = vmatpush.bf16.msra.mxu0 %v1616
        %1634 = vmatpush.bf16.msra.mxu0 %v1615
        %1635 = vmatpush.bf16.msra.mxu0 %v1614
        %1636 = vmatpush.bf16.msra.mxu0 %v1613
        %1637 = vmatmul.bf16.gmra.mxu0 %v1560
        %v1638 = vpop.f32.mrf.mxu0
        %v1639 = vadd.f32 %v1579, %v1638
        %v1640 = vpop.f32.mrf.mxu0
        %v1641 = vadd.f32 %v1579, %v1640
        %1642 = vdwg.mxu0
        %v1643 = vadd.f32 %v1518, %v1639
        %v1644 = vadd.f32 %v1519, %v1641
        %v1645 = vld [vmem:[%s870] sm:$0x1]
        %v1646 = vld [vmem:[%s873] sm:$0x1]
        %v1647 = vsel %vm910, %v1643, 0.0
        %1648 = vadd.xlane.f32.xlu0 %v1647
        %v1649 = vpop.xlane.xlu0 %1648
        %v1650 = vsel %vm910, %v1644, 0.0
        %1651 = vadd.xlane.f32.xlu0 %v1650
        %v1652 = vpop.xlane.xlu0 %1651
        %v1653 = vmul.f32 %v1649, %v1471
        %v1654 = vmul.f32 %v1652, %v1471
        %v1655 = vsub.f32 %v1643, %v1653
        %v1656 = vsub.f32 %v1644, %v1654
        %v1657 = vmul.f32 %v1655, %v1655
        %v1658 = vmul.f32 %v1656, %v1656
        %v1659 = vsel %vm910, %v1657, 0.0
        %1660 = vadd.xlane.f32.xlu0 %v1659
        %v1661 = vpop.xlane.xlu0 %1660
        %v1662 = vsel %vm910, %v1658, 0.0
        %1663 = vadd.xlane.f32.xlu0 %v1662
        %v1664 = vpop.xlane.xlu0 %1663
        %v1665 = vmul.f32 %v1661, %v1471
        %v1666 = vmul.f32 %v1664, %v1471
        %v1667 = vadd.f32 %v1665, 1e-05
        %v1668 = vadd.f32 %v1666, 1e-05
        %v1669 = vrsqrt.pop %v1667
        %v1670 = vmul.f32 %v1669, %v1667
        %v1671 = vmul.f32 %v1670, %v1669
        %v1672 = vmul.f32 0.5, %v1671
        %v1673 = vsub.f32 1.5, %v1672
        %v1674 = vmul.f32 %v1669, %v1673
        %vm1675 = vweird.f32 %v1667
        %vm1676 = vweird.f32 %v1669
        %vm1677 = vmor %vm1675, %vm1676
        %v1678 = vsel %vm1677, %v1669, %v1674
        %v1679 = vrsqrt.pop %v1668
        %v1680 = vmul.f32 %v1679, %v1668
        %v1681 = vmul.f32 %v1680, %v1679
        %v1682 = vmul.f32 0.5, %v1681
        %v1683 = vsub.f32 1.5, %v1682
        %v1684 = vmul.f32 %v1679, %v1683
        %vm1685 = vweird.f32 %v1668
        %vm1686 = vweird.f32 %v1679
        %vm1687 = vmor %vm1685, %vm1686
        %v1688 = vsel %vm1687, %v1679, %v1684
        %v1689 = vmul.f32 %v1655, %v1678
        %v1690 = vmul.f32 %v1656, %v1688
        %v1692 = vperm.slane %v1645, 0
        %v1694 = vmul.f32 %v1689, %v1692
        %v1695 = vmul.f32 %v1690, %v1692
        %v1697 = vperm.slane %v1646, 0
        %v1699 = vadd.f32 %v1694, %v1697
        %v1700 = vadd.f32 %v1695, %v1697
        %p1701 = scmp.eq.s32.totalorder %s40, 1
        // Predicated region
        $region109: #{transformer_forward.1} parent=99 // pred_check
          %p1702 = pneg %p1701
        $region110: #{transformer_forward.1} parent=99 // pred_check_branch
          %1704 = sbr.rel (%p1702) target = $region112
        $region111: #{transformer_forward.1} parent=99 // pred_region
          %v1705 = vld [vmem:[%s14] sm:$0x1]
          %v1706 = vld [vmem:[%s15] sm:$0x1]
          %v1707 = vsel %vm910, %v1699, 0.0
          %1708 = vadd.xlane.f32.xlu0 %v1707
          %v1709 = vpop.xlane.xlu0 %1708
          %v1710 = vsel %vm910, %v1700, 0.0
          %1711 = vadd.xlane.f32.xlu0 %v1710
          %v1712 = vpop.xlane.xlu0 %1711
          %v1713 = vmul.f32 %v1709, %v1471
          %v1714 = vmul.f32 %v1712, %v1471
          %v1715 = vsub.f32 %v1699, %v1713
          %v1716 = vsub.f32 %v1700, %v1714
          %v1717 = vmul.f32 %v1715, %v1715
          %v1718 = vmul.f32 %v1716, %v1716
          %v1719 = vsel %vm910, %v1717, 0.0
          %1720 = vadd.xlane.f32.xlu0 %v1719
          %v1721 = vpop.xlane.xlu0 %1720
          %v1722 = vsel %vm910, %v1718, 0.0
          %1723 = vadd.xlane.f32.xlu0 %v1722
          %v1724 = vpop.xlane.xlu0 %1723
          %v1725 = vmul.f32 %v1721, %v1471
          %v1726 = vmul.f32 %v1724, %v1471
          %v1727 = vadd.f32 %v1725, 1e-05
          %v1728 = vadd.f32 %v1726, 1e-05
          %v1729 = vrsqrt.pop %v1727
          %v1730 = vmul.f32 %v1729, %v1727
          %v1731 = vmul.f32 %v1730, %v1729
          %v1732 = vmul.f32 0.5, %v1731
          %v1733 = vsub.f32 1.5, %v1732
          %v1734 = vmul.f32 %v1729, %v1733
          %vm1735 = vweird.f32 %v1727
          %vm1736 = vweird.f32 %v1729
          %vm1737 = vmor %vm1735, %vm1736
          %v1738 = vsel %vm1737, %v1729, %v1734
          %v1739 = vrsqrt.pop %v1728
          %v1740 = vmul.f32 %v1739, %v1728
          %v1741 = vmul.f32 %v1740, %v1739
          %v1742 = vmul.f32 0.5, %v1741
          %v1743 = vsub.f32 1.5, %v1742
          %v1744 = vmul.f32 %v1739, %v1743
          %vm1745 = vweird.f32 %v1728
          %vm1746 = vweird.f32 %v1739
          %vm1747 = vmor %vm1745, %vm1746
          %v1748 = vsel %vm1747, %v1739, %v1744
          %v1749 = vmul.f32 %v1715, %v1738
          %v1750 = vmul.f32 %v1716, %v1748
          %v1752 = vperm.slane %v1705, 0
          %v1754 = vmul.f32 %v1749, %v1752
          %v1755 = vmul.f32 %v1750, %v1752
          %v1757 = vperm.slane %v1706, 0
          %v1759 = vadd.f32 %v1754, %v1757
          %v1760 = vadd.f32 %v1755, %v1757
          %1761 = vst.msk [vmem:[#allocation2] sm:$0xff] %vm910, %v1759
          %1762 = vst.msk [vmem:[#allocation2 + $0x8] sm:$0xff] %vm910, %v1760
        $region112: #{transformer_forward.1} parent=99 // pred_fallthru
          _
        %p1763 = scmp.ne.s32.totalorder %s40, 1
        // Predicated region
        $region113: #{transformer_forward.1} parent=99 // pred_check
          %p1764 = pneg %p1763
        $region114: #{transformer_forward.1} parent=99 // pred_check_branch
          %1766 = sbr.rel (%p1764) target = $region116
        $region115: #{transformer_forward.1} parent=99 // pred_region
          %1767 = vst.msk [vmem:[#allocation2] sm:$0xff] %vm910, %v1699
          %1768 = vst.msk [vmem:[#allocation2 + $0x8] sm:$0xff] %vm910, %v1700
        $region116: #{transformer_forward.1} parent=99 // pred_fallthru
          _
        %p1769 = scmp.eq.s32.totalorder %s40, 3
        // Predicated region
        $region117: #{transformer_forward.1} parent=99 // pred_check
          %p1770 = pneg %p1769
        $region118: #{transformer_forward.1} parent=99 // pred_check_branch
          %1772 = sbr.rel (%p1770) target = $region120
        $region119: #{transformer_forward.1} parent=99 // pred_region
          %v1773 = vld [vmem:[%s16] sm:$0x1]
          %v1774 = vld [vmem:[%s17] sm:$0x1]
          %v1775 = vsel %vm910, %v1699, 0.0
          %1776 = vadd.xlane.f32.xlu0 %v1775
          %v1777 = vpop.xlane.xlu0 %1776
          %v1778 = vsel %vm910, %v1700, 0.0
          %1779 = vadd.xlane.f32.xlu0 %v1778
          %v1780 = vpop.xlane.xlu0 %1779
          %v1781 = vmul.f32 %v1777, %v1471
          %v1782 = vmul.f32 %v1780, %v1471
          %v1783 = vsub.f32 %v1699, %v1781
          %v1784 = vsub.f32 %v1700, %v1782
          %v1785 = vmul.f32 %v1783, %v1783
          %v1786 = vmul.f32 %v1784, %v1784
          %v1787 = vsel %vm910, %v1785, 0.0
          %1788 = vadd.xlane.f32.xlu0 %v1787
          %v1789 = vpop.xlane.xlu0 %1788
          %v1790 = vsel %vm910, %v1786, 0.0
          %1791 = vadd.xlane.f32.xlu0 %v1790
          %v1792 = vpop.xlane.xlu0 %1791
          %v1793 = vmul.f32 %v1789, %v1471
          %v1794 = vmul.f32 %v1792, %v1471
          %v1795 = vadd.f32 %v1793, 1e-05
          %v1796 = vadd.f32 %v1794, 1e-05
          %v1797 = vrsqrt.pop %v1795
          %v1798 = vmul.f32 %v1797, %v1795
          %v1799 = vmul.f32 %v1798, %v1797
          %v1800 = vmul.f32 0.5, %v1799
          %v1801 = vsub.f32 1.5, %v1800
          %v1802 = vmul.f32 %v1797, %v1801
          %vm1803 = vweird.f32 %v1795
          %vm1804 = vweird.f32 %v1797
          %vm1805 = vmor %vm1803, %vm1804
          %v1806 = vsel %vm1805, %v1797, %v1802
          %v1807 = vrsqrt.pop %v1796
          %v1808 = vmul.f32 %v1807, %v1796
          %v1809 = vmul.f32 %v1808, %v1807
          %v1810 = vmul.f32 0.5, %v1809
          %v1811 = vsub.f32 1.5, %v1810
          %v1812 = vmul.f32 %v1807, %v1811
          %vm1813 = vweird.f32 %v1796
          %vm1814 = vweird.f32 %v1807
          %vm1815 = vmor %vm1813, %vm1814
          %v1816 = vsel %vm1815, %v1807, %v1812
          %v1817 = vmul.f32 %v1783, %v1806
          %v1818 = vmul.f32 %v1784, %v1816
          %v1820 = vperm.slane %v1773, 0
          %v1822 = vmul.f32 %v1817, %v1820
          %v1823 = vmul.f32 %v1818, %v1820
          %v1825 = vperm.slane %v1774, 0
          %v1827 = vadd.f32 %v1822, %v1825
          %v1828 = vadd.f32 %v1823, %v1825
          %v1829 = vpack.c.bf16 %v1828, %v1827
          %v1830 = vld [vmem:[%s18] sm:$0xf]
          %v1831 = vld [vmem:[%s18 + $0x4] sm:$0xf]
          %v1832 = vld [vmem:[%s18 + $0x8] sm:$0xf]
          %v1833 = vld [vmem:[%s18 + $0xc] sm:$0xf]
          %v1834 = vld [vmem:[%s19] sm:$0x1]
          %v1836 = vperm.slane %v1834, 0
          %v1842 = vunpack.c.l.b16 %v1830
          %v1843 = vunpack.c.l.b16 %v1831
          %v1844 = vunpack.c.l.b16 %v1832
          %v1845 = vunpack.c.l.b16 %v1833
          %v1846 = vpack.c.b16 %v1843, %v1842
          %v1847 = vpack.c.b16 %v1845, %v1844
          %v1851 = vsel %vm910, %v1829, 0
          %1853 = vmatpush.bf16.msra.mxu0 0
          %1854 = vmatpush.bf16.msra.mxu0 0
          %1855 = vmatpush.bf16.msra.mxu0 0
          %1856 = vmatpush.bf16.msra.mxu0 0
          %1857 = vmatpush.bf16.msra.mxu0 0
          %1858 = vmatpush.bf16.msra.mxu0 0
          %1859 = vmatpush.bf16.msra.mxu0 %v1847
          %1860 = vmatpush.bf16.msra.mxu0 %v1846
          %1861 = vmatmul.bf16.gmra.mxu0 %v1851
          %v1862 = vpop.f32.mrf.mxu0
          %v1863 = vadd.f32 %v1836, %v1862
          %v1864 = vpop.f32.mrf.mxu0
          %v1865 = vadd.f32 %v1836, %v1864
          %1866 = vdwg.mxu0
          %1867 = vst.msk [vmem:[#allocation6] sm:$0xff] %vm910, %v1863
          %1868 = vst.msk [vmem:[#allocation6 + $0x8] sm:$0xff] %vm910, %v1865
        $region120: #{transformer_forward.1} parent=99 // pred_fallthru
          _
        // Predicated region
        $region121: #{transformer_forward.1} parent=99 // pred_check
          %p1869 = pneg %p555
        $region122: #{transformer_forward.1} parent=99 // pred_check_branch
          %1871 = sbr.rel (%p1869) target = $region124
        $region123: #{transformer_forward.1} parent=99 // pred_region
          %s1872 = smul.u32 2, %s39
          %1874 = vsyncadd [#allocation5], 0
          %s1875 = smul.addr %s1872, 8
          %s1876 = scalar_lea.hbm %s20, %s1875
          %s1877 = sshll.u32 [#allocation6], 4
          %s1878 = int_to_ptr.vmem [resolvable:$true] %s1877
          %s1879 = sshll.u32 %s1876, 4
          %s1880 = int_to_ptr.hbm [resolvable:$true] %s1879
          %1885 = dma.vmem_to_hbm [thread:$0]  %s1878, 256, %s1880, [#allocation5], 128, 128, 8
        $region124: #{transformer_forward.1} parent=99 // pred_fallthru
          _
        // Predicated region
        $region125: #{transformer_forward.1} parent=99 // pred_check
          %p1886 = pneg %p555
        $region126: #{transformer_forward.1} parent=99 // pred_check_branch
          %1888 = sbr.rel (%p1886) target = $region128
        $region127: #{transformer_forward.1} parent=99 // pred_region
          %1890 = dma.done [#allocation5], 256
        $region128: #{transformer_forward.1} parent=99 // pred_fallthru
          _
      $region100: #{transformer_forward.1} parent=5 // pred_fallthru
        _
      %p1891 = scmp.le.s32.totalorder 2, %s30
      // Predicated region
      $region129: #{transformer_forward.1} parent=5 // pred_check
        %p1892 = pneg %p1891
      $region130: #{transformer_forward.1} parent=5 // pred_check_branch
        %1894 = sbr.rel (%p1892) target = $region132
      $region131: #{transformer_forward.1} parent=5 // pred_region
        %s1895 = ssub.s32 %s30, 2
      $region132: #{transformer_forward.1} parent=5 // pred_fallthru
        _
    $region6: #{transformer_forward.1} parent=1 // loop_footer
      %s34 = sadd.s32 1, %s30
    $region7: #{transformer_forward.1} parent=1 // loop_footer_branch
      %29 = sbr.rel target = $region3
    $region8: #{transformer_forward.1} parent=1 // loop_exit
      _
    %1896 = vsyncpa [#allocation4], 1
    %s1897 = scalar_lea.sflag [#allocation4], 1
    %1898 = vsyncpa %s1897, 1
    %1899 = vsyncpa [#allocation5], 1
    %s1900 = scalar_lea.sflag [#allocation5], 1
    %1901 = vsyncpa %s1900, 1

</llo_original>
